<compile_context>
chip_gen: v6e
topology: v6e:2x2x1
jax: 0.10.0
libtpu: 0.0.40
codegen_flags: <defaults>
</compile_context>

<pallas_src>
import functools

import numpy as np
import jax
import jax.numpy as jnp
from jax.experimental import pallas as pl
from jax.experimental.pallas import tpu as pltpu

_LANES = 128
_SUBLANES = 8
_NUM_GROUPS = 6
# accumulator rows: 0 = huber sum; then per group k: [count, sum(label), sum(pred)]
_ACC_ROWS = 1 + 3 * _NUM_GROUPS


def _iqa_loss_kernel(x_ref, out_ref, acc_ref, *, n_true):
    """x_ref: (3, TR, 128) f32 tile with planes [pred, group_id, label].

    acc_ref: (_ACC_ROWS, 1, 128) f32 running per-lane partial sums.
    out_ref: (1, 1) f32 final loss (written only on the last grid step).
    """
    step = pl.program_id(0)
    last = pl.num_programs(0) - 1

    @pl.when(step == 0)
    def _init():
        acc_ref[...] = jnp.zeros_like(acc_ref)

    pred = x_ref[0]          # (TR, 128)
    gid = x_ref[1]           # (TR, 128) raw group ids (padding = -1.0)
    lbl = x_ref[2]           # (TR, 128)

    def fold(v):             # (TR, 128) -> (1, 128): sublane partial sums (VPU adds)
        return jnp.sum(v, axis=0, keepdims=True)

    # ---- loss1 partials: smooth-L1 (beta = 1); padded lanes give d == 0 -> 0.
    d = pred - lbl
    ad = jnp.abs(d)
    huber = jnp.where(ad < 1.0, 0.5 * d * d, ad - 0.5)
    acc_ref[0] += fold(huber)

    # ---- per-group partial sums via one robust integer group index.
    g = jnp.floor(gid * 10.0 + 0.5) - 3.0       # k in {0..5}; padding -> -13
    for k in range(_NUM_GROUPS):
        m = g == jnp.float32(k)
        acc_ref[1 + 3 * k + 0] += fold(jnp.where(m, 1.0, 0.0))
        acc_ref[1 + 3 * k + 1] += fold(jnp.where(m, lbl, 0.0))
        acc_ref[1 + 3 * k + 2] += fold(jnp.where(m, pred, 0.0))

    # ---- finalize: one-off tiny lane reductions + pair loss, single store.
    @pl.when(step == last)
    def _finalize():
        def total(row):      # (1, 128) -> (1, 1)
            return jnp.sum(row, axis=1, keepdims=True)

        loss1 = total(acc_ref[0]) / jnp.float32(n_true)

        res = []
        prd = []
        for k in range(_NUM_GROUPS):
            cnt = total(acc_ref[1 + 3 * k + 0])
            s_lbl = total(acc_ref[1 + 3 * k + 1])
            s_prd = total(acc_ref[1 + 3 * k + 2])
            nonempty = cnt > 0.0
            safe = jnp.maximum(cnt, 1.0)
            res.append(jnp.where(nonempty, s_lbl / safe, 0.0))
            prd.append(jnp.where(nonempty, s_prd / safe, 0.0))

        pair = jnp.zeros((1, 1), jnp.float32)
        for i in range(_NUM_GROUPS - 1):
            for j in range(i + 1, _NUM_GROUPS):
                pair = pair + jnp.abs(res[i] - res[j] - (prd[i] - prd[j]))

        # same op order as the torch module: loss1 + (0.067 * loss2) * 4
        out_ref[...] = loss1 + 0.067 * pair * 4.0


def iqa_loss(y_pred, y, *, max_tile_rows=512):
    """y_pred: (N,) float; y: (N, 2) float with y[:,0]=group id, y[:,1]=label.

    max_tile_rows must be a multiple of 8 (rows of 128 lanes per grid step).
    """
    n = int(y_pred.shape[0])
    pred = y_pred.reshape(n).astype(jnp.float32)
    gid = y[:, 0].astype(jnp.float32)
    lbl = y[:, 1].astype(jnp.float32)

    # --- layout plumbing only: pad N to whole (rows, 128) tiles, pack to (3, R, 128).
    rows = -(-n // _LANES)
    tile_rows = min(max_tile_rows, -(-rows // _SUBLANES) * _SUBLANES)
    rows_pad = -(-rows // tile_rows) * tile_rows
    n_pad = rows_pad * _LANES

    def plane(v, fill):
        return jnp.pad(v, (0, n_pad - n), constant_values=fill).reshape(
            rows_pad, _LANES)

    packed = jnp.stack(
        [plane(pred, 0.0), plane(gid, -1.0), plane(lbl, 0.0)], axis=0)

    grid = (rows_pad // tile_rows,)
    out = pl.pallas_call(
        functools.partial(_iqa_loss_kernel, n_true=n),
        out_shape=jax.ShapeDtypeStruct((1, 1), jnp.float32),
        grid=grid,
        in_specs=[
            pl.BlockSpec((3, tile_rows, _LANES), lambda i: (0, i, 0)),
        ],
        out_specs=pl.BlockSpec((1, 1), lambda i: (0, 0)),
        scratch_shapes=[pltpu.VMEM((_ACC_ROWS, 1, _LANES), jnp.float32)],
        compiler_params=pltpu.CompilerParams(
            dimension_semantics=("arbitrary",),
            vmem_limit_bytes=32 * 1024 * 1024,
        ),
    )(packed)
    return out[0, 0]


def _reference(y_pred, y):
    """Pure-numpy replica of the torch forward (for verification)."""
    yp = np.asarray(y_pred, np.float32)
    yn = np.asarray(y, np.float32)
    d = yp - yn[:, 1]
    ad = np.abs(d)
    loss1 = float(np.mean(np.where(ad < 1.0, 0.5 * d * d, ad - 0.5)))
    res = [0.0] * 6
    prd = [0.0] * 6
    for k in range(6):
        sel = yn[:, 0] == np.float32((k + 3) / 10)
        if sel.any():
            res[k] = float(yn[sel, 1].mean())
            prd[k] = float(yp[sel].mean())
    loss2 = 0.0
    for i in range(5):
        for j in range(i + 1, 6):
            loss2 += abs(res[i] - res[j] - (prd[i] - prd[j]))
    return loss1 + 0.067 * loss2 * 4


if __name__ == "__main__":
    key = jax.random.PRNGKey(0)
    k1, k2, k3, k4 = jax.random.split(key, 4)

    # --- small case (typical batch use of the loss; single grid step). ---
    N = 8
    groups = jnp.array([(k % 6 + 3) / 10 for k in range(N)], dtype=jnp.float32)
    labels = jax.random.uniform(k1, (N,), dtype=jnp.float32)
    y = jnp.stack([groups, labels], axis=1)                     # (N, 2)
    y_pred = labels + 0.1 * jax.random.normal(k2, (N,), dtype=jnp.float32)

    loss = jax.block_until_ready(iqa_loss(y_pred, y))
    ref = _reference(y_pred, y)
    assert abs(float(loss) - ref) <= 1e-5 + 1e-4 * abs(ref), (float(loss), ref)

    # --- larger, non-aligned case exercising padding + multi-step accumulation.
    N2 = 2000  # pads to 2048 lanes; max_tile_rows=8 -> grid of 2 reduction steps
    groups2 = jnp.array([(k % 6 + 3) / 10 for k in range(N2)], dtype=jnp.float32)
    labels2 = jax.random.uniform(k3, (N2,), dtype=jnp.float32)
    y2 = jnp.stack([groups2, labels2], axis=1)                  # (N2, 2)
    y_pred2 = labels2 + 0.1 * jax.random.normal(k4, (N2,), dtype=jnp.float32)

    loss_big = jax.block_until_ready(iqa_loss(y_pred2, y2, max_tile_rows=8))
    ref_big = _reference(y_pred2, y2)
    assert abs(float(loss_big) - ref_big) <= 1e-4 + 1e-3 * abs(ref_big), (
        float(loss_big), ref_big)

    print("KERNEL_OK")
</pallas_src>

<mosaic_0001>
module attributes {stable_mosaic.version = 11 : i64} {
  func.func @_iqa_loss_kernel(%arg0: i32, %arg1: memref<3x8x128xf32, #tpu.memory_space<vmem>>, %arg2: memref<1x1xf32, #tpu.memory_space<vmem>>, %arg3: memref<19x1x128xf32, #tpu.memory_space<vmem>>) attributes {dimension_semantics = [#tpu.dimension_semantics<arbitrary>], iteration_bounds = array<i64: 1>, scalar_prefetch = 0 : i64, scratch_operands = 1 : i64, tpu.core_type = #tpu.core_type<tc>, window_params = [{transform_indices = @transform_0, window_bounds = array<i64: 3, 8, 128>}, {pipeline_mode = #tpu.pipeline_mode<synchronous>, transform_indices = @transform_1, window_bounds = array<i64: 1, 1>}]} {
    %c0_i32 = arith.constant 0 : i32
    %0 = arith.cmpi eq, %arg0, %c0_i32 : i32
    %1 = arith.extui %0 : i1 to i32
    %c0_i32_0 = arith.constant 0 : i32
    %2 = arith.cmpi ne, %1, %c0_i32_0 : i32
    scf.if %2 {
      %cst_161 = arith.constant 0.000000e+00 : f32
      %235 = vector.broadcast %cst_161 : f32 to vector<19x1x128xf32>
      %c0_162 = arith.constant 0 : index
      %c0_163 = arith.constant 0 : index
      %c0_164 = arith.constant 0 : index
      %236 = vector.load %arg3[%c0_162, %c0_163, %c0_164] : memref<19x1x128xf32, #tpu.memory_space<vmem>>, vector<19x1x128xf32>
      tpu.vector_store %arg3[%c0_162, %c0_163, %c0_164], %235 {strides = array<i32>} : memref<19x1x128xf32, #tpu.memory_space<vmem>>, vector<19x1x128xf32>,
    } else {
    }
    %c0 = arith.constant 0 : index
    %c0_1 = arith.constant 0 : index
    %c0_2 = arith.constant 0 : index
    %3 = vector.load %arg1[%c0, %c0_1, %c0_2] : memref<3x8x128xf32, #tpu.memory_space<vmem>>, vector<1x8x128xf32>
    %4 = vector.shape_cast %3 : vector<1x8x128xf32> to vector<8x128xf32>
    %c1 = arith.constant 1 : index
    %c0_3 = arith.constant 0 : index
    %c0_4 = arith.constant 0 : index
    %5 = vector.load %arg1[%c1, %c0_3, %c0_4] : memref<3x8x128xf32, #tpu.memory_space<vmem>>, vector<1x8x128xf32>
    %6 = vector.shape_cast %5 : vector<1x8x128xf32> to vector<8x128xf32>
    %c2 = arith.constant 2 : index
    %c0_5 = arith.constant 0 : index
    %c0_6 = arith.constant 0 : index
    %7 = vector.load %arg1[%c2, %c0_5, %c0_6] : memref<3x8x128xf32, #tpu.memory_space<vmem>>, vector<1x8x128xf32>
    %8 = vector.shape_cast %7 : vector<1x8x128xf32> to vector<8x128xf32>
    %9 = arith.subf %4, %8 : vector<8x128xf32>
    %10 = math.absf %9 : vector<8x128xf32>
    %cst = arith.constant 1.000000e+00 : f32
    %11 = vector.broadcast %cst : f32 to vector<8x128xf32>
    %12 = arith.cmpf olt, %10, %11 : vector<8x128xf32>
    %cst_7 = arith.constant 5.000000e-01 : f32
    %13 = vector.broadcast %cst_7 : f32 to vector<8x128xf32>
    %14 = arith.mulf %13, %9 : vector<8x128xf32>
    %15 = arith.mulf %14, %9 : vector<8x128xf32>
    %cst_8 = arith.constant 5.000000e-01 : f32
    %16 = vector.broadcast %cst_8 : f32 to vector<8x128xf32>
    %17 = arith.subf %10, %16 : vector<8x128xf32>
    %18 = arith.select %12, %15, %17 : vector<8x128xi1>, vector<8x128xf32>
    %c0_9 = arith.constant 0 : index
    %c0_10 = arith.constant 0 : index
    %c0_11 = arith.constant 0 : index
    %19 = vector.load %arg3[%c0_9, %c0_10, %c0_11] : memref<19x1x128xf32, #tpu.memory_space<vmem>>, vector<1x1x128xf32>
    %20 = vector.shape_cast %19 : vector<1x1x128xf32> to vector<1x128xf32>
    %cst_12 = arith.constant dense<0.000000e+00> : vector<128xf32>
    %21 = vector.multi_reduction <add>, %18, %cst_12 [0] : vector<8x128xf32> to vector<128xf32>
    %22 = vector.shape_cast %21 : vector<128xf32> to vector<1x128xf32>
    %23 = arith.addf %20, %22 : vector<1x128xf32>
    %c0_13 = arith.constant 0 : index
    %c0_14 = arith.constant 0 : index
    %c0_15 = arith.constant 0 : index
    %24 = vector.load %arg3[%c0_13, %c0_14, %c0_15] : memref<19x1x128xf32, #tpu.memory_space<vmem>>, vector<1x1x128xf32>
    %25 = vector.shape_cast %24 : vector<1x1x128xf32> to vector<1x128xf32>
    %26 = vector.shape_cast %23 : vector<1x128xf32> to vector<1x1x128xf32>
    tpu.vector_store %arg3[%c0_13, %c0_14, %c0_15], %26 {strides = array<i32>} : memref<19x1x128xf32, #tpu.memory_space<vmem>>, vector<1x1x128xf32>,
    %cst_16 = arith.constant 1.000000e+01 : f32
    %27 = vector.broadcast %cst_16 : f32 to vector<8x128xf32>
    %28 = arith.mulf %6, %27 : vector<8x128xf32>
    %cst_17 = arith.constant 5.000000e-01 : f32
    %29 = vector.broadcast %cst_17 : f32 to vector<8x128xf32>
    %30 = arith.addf %28, %29 : vector<8x128xf32>
    %31 = math.floor %30 : vector<8x128xf32>
    %cst_18 = arith.constant 3.000000e+00 : f32
    %32 = vector.broadcast %cst_18 : f32 to vector<8x128xf32>
    %33 = arith.subf %31, %32 : vector<8x128xf32>
    %cst_19 = arith.constant 0.000000e+00 : f32
    %34 = vector.broadcast %cst_19 : f32 to vector<8x128xf32>
    %35 = arith.cmpf oeq, %33, %34 : vector<8x128xf32>
    %c1_20 = arith.constant 1 : index
    %c0_21 = arith.constant 0 : index
    %c0_22 = arith.constant 0 : index
    %36 = vector.load %arg3[%c1_20, %c0_21, %c0_22] : memref<19x1x128xf32, #tpu.memory_space<vmem>>, vector<1x1x128xf32>
    %37 = vector.shape_cast %36 : vector<1x1x128xf32> to vector<1x128xf32>
    %cst_23 = arith.constant 1.000000e+00 : f32
    %cst_24 = arith.constant 0.000000e+00 : f32
    %38 = vector.broadcast %cst_23 : f32 to vector<8x128xf32>
    %39 = vector.broadcast %cst_24 : f32 to vector<8x128xf32>
    %40 = arith.select %35, %38, %39 : vector<8x128xi1>, vector<8x128xf32>
    %cst_25 = arith.constant dense<0.000000e+00> : vector<128xf32>
    %41 = vector.multi_reduction <add>, %40, %cst_25 [0] : vector<8x128xf32> to vector<128xf32>
    %42 = vector.shape_cast %41 : vector<128xf32> to vector<1x128xf32>
    %43 = arith.addf %37, %42 : vector<1x128xf32>
    %c1_26 = arith.constant 1 : index
    %c0_27 = arith.constant 0 : index
    %c0_28 = arith.constant 0 : index
    %44 = vector.load %arg3[%c1_26, %c0_27, %c0_28] : memref<19x1x128xf32, #tpu.memory_space<vmem>>, vector<1x1x128xf32>
    %45 = vector.shape_cast %44 : vector<1x1x128xf32> to vector<1x128xf32>
    %46 = vector.shape_cast %43 : vector<1x128xf32> to vector<1x1x128xf32>
    tpu.vector_store %arg3[%c1_26, %c0_27, %c0_28], %46 {strides = array<i32>} : memref<19x1x128xf32, #tpu.memory_space<vmem>>, vector<1x1x128xf32>,
    %c2_29 = arith.constant 2 : index
    %c0_30 = arith.constant 0 : index
    %c0_31 = arith.constant 0 : index
    %47 = vector.load %arg3[%c2_29, %c0_30, %c0_31] : memref<19x1x128xf32, #tpu.memory_space<vmem>>, vector<1x1x128xf32>
    %48 = vector.shape_cast %47 : vector<1x1x128xf32> to vector<1x128xf32>
    %cst_32 = arith.constant 0.000000e+00 : f32
    %49 = vector.broadcast %cst_32 : f32 to vector<8x128xf32>
    %50 = arith.select %35, %8, %49 : vector<8x128xi1>, vector<8x128xf32>
    %cst_33 = arith.constant dense<0.000000e+00> : vector<128xf32>
    %51 = vector.multi_reduction <add>, %50, %cst_33 [0] : vector<8x128xf32> to vector<128xf32>
    %52 = vector.shape_cast %51 : vector<128xf32> to vector<1x128xf32>
    %53 = arith.addf %48, %52 : vector<1x128xf32>
    %c2_34 = arith.constant 2 : index
    %c0_35 = arith.constant 0 : index
    %c0_36 = arith.constant 0 : index
    %54 = vector.load %arg3[%c2_34, %c0_35, %c0_36] : memref<19x1x128xf32, #tpu.memory_space<vmem>>, vector<1x1x128xf32>
    %55 = vector.shape_cast %54 : vector<1x1x128xf32> to vector<1x128xf32>
    %56 = vector.shape_cast %53 : vector<1x128xf32> to vector<1x1x128xf32>
    tpu.vector_store %arg3[%c2_34, %c0_35, %c0_36], %56 {strides = array<i32>} : memref<19x1x128xf32, #tpu.memory_space<vmem>>, vector<1x1x128xf32>,
    %c3 = arith.constant 3 : index
    %c0_37 = arith.constant 0 : index
    %c0_38 = arith.constant 0 : index
    %57 = vector.load %arg3[%c3, %c0_37, %c0_38] : memref<19x1x128xf32, #tpu.memory_space<vmem>>, vector<1x1x128xf32>
    %58 = vector.shape_cast %57 : vector<1x1x128xf32> to vector<1x128xf32>
    %cst_39 = arith.constant 0.000000e+00 : f32
    %59 = vector.broadcast %cst_39 : f32 to vector<8x128xf32>
    %60 = arith.select %35, %4, %59 : vector<8x128xi1>, vector<8x128xf32>
    %cst_40 = arith.constant dense<0.000000e+00> : vector<128xf32>
    %61 = vector.multi_reduction <add>, %60, %cst_40 [0] : vector<8x128xf32> to vector<128xf32>
    %62 = vector.shape_cast %61 : vector<128xf32> to vector<1x128xf32>
    %63 = arith.addf %58, %62 : vector<1x128xf32>
    %c3_41 = arith.constant 3 : index
    %c0_42 = arith.constant 0 : index
    %c0_43 = arith.constant 0 : index
    %64 = vector.load %arg3[%c3_41, %c0_42, %c0_43] : memref<19x1x128xf32, #tpu.memory_space<vmem>>, vector<1x1x128xf32>
    %65 = vector.shape_cast %64 : vector<1x1x128xf32> to vector<1x128xf32>
    %66 = vector.shape_cast %63 : vector<1x128xf32> to vector<1x1x128xf32>
    tpu.vector_store %arg3[%c3_41, %c0_42, %c0_43], %66 {strides = array<i32>} : memref<19x1x128xf32, #tpu.memory_space<vmem>>, vector<1x1x128xf32>,
    %cst_44 = arith.constant 1.000000e+00 : f32
    %67 = vector.broadcast %cst_44 : f32 to vector<8x128xf32>
    %68 = arith.cmpf oeq, %33, %67 : vector<8x128xf32>
    %c4 = arith.constant 4 : index
    %c0_45 = arith.constant 0 : index
    %c0_46 = arith.constant 0 : index
    %69 = vector.load %arg3[%c4, %c0_45, %c0_46] : memref<19x1x128xf32, #tpu.memory_space<vmem>>, vector<1x1x128xf32>
    %70 = vector.shape_cast %69 : vector<1x1x128xf32> to vector<1x128xf32>
    %cst_47 = arith.constant 1.000000e+00 : f32
    %cst_48 = arith.constant 0.000000e+00 : f32
    %71 = vector.broadcast %cst_47 : f32 to vector<8x128xf32>
    %72 = vector.broadcast %cst_48 : f32 to vector<8x128xf32>
    %73 = arith.select %68, %71, %72 : vector<8x128xi1>, vector<8x128xf32>
    %cst_49 = arith.constant dense<0.000000e+00> : vector<128xf32>
    %74 = vector.multi_reduction <add>, %73, %cst_49 [0] : vector<8x128xf32> to vector<128xf32>
    %75 = vector.shape_cast %74 : vector<128xf32> to vector<1x128xf32>
    %76 = arith.addf %70, %75 : vector<1x128xf32>
    %c4_50 = arith.constant 4 : index
    %c0_51 = arith.constant 0 : index
    %c0_52 = arith.constant 0 : index
    %77 = vector.load %arg3[%c4_50, %c0_51, %c0_52] : memref<19x1x128xf32, #tpu.memory_space<vmem>>, vector<1x1x128xf32>
    %78 = vector.shape_cast %77 : vector<1x1x128xf32> to vector<1x128xf32>
    %79 = vector.shape_cast %76 : vector<1x128xf32> to vector<1x1x128xf32>
    tpu.vector_store %arg3[%c4_50, %c0_51, %c0_52], %79 {strides = array<i32>} : memref<19x1x128xf32, #tpu.memory_space<vmem>>, vector<1x1x128xf32>,
    %c5 = arith.constant 5 : index
    %c0_53 = arith.constant 0 : index
    %c0_54 = arith.constant 0 : index
    %80 = vector.load %arg3[%c5, %c0_53, %c0_54] : memref<19x1x128xf32, #tpu.memory_space<vmem>>, vector<1x1x128xf32>
    %81 = vector.shape_cast %80 : vector<1x1x128xf32> to vector<1x128xf32>
    %cst_55 = arith.constant 0.000000e+00 : f32
    %82 = vector.broadcast %cst_55 : f32 to vector<8x128xf32>
    %83 = arith.select %68, %8, %82 : vector<8x128xi1>, vector<8x128xf32>
    %cst_56 = arith.constant dense<0.000000e+00> : vector<128xf32>
    %84 = vector.multi_reduction <add>, %83, %cst_56 [0] : vector<8x128xf32> to vector<128xf32>
    %85 = vector.shape_cast %84 : vector<128xf32> to vector<1x128xf32>
    %86 = arith.addf %81, %85 : vector<1x128xf32>
    %c5_57 = arith.constant 5 : index
    %c0_58 = arith.constant 0 : index
    %c0_59 = arith.constant 0 : index
    %87 = vector.load %arg3[%c5_57, %c0_58, %c0_59] : memref<19x1x128xf32, #tpu.memory_space<vmem>>, vector<1x1x128xf32>
    %88 = vector.shape_cast %87 : vector<1x1x128xf32> to vector<1x128xf32>
    %89 = vector.shape_cast %86 : vector<1x128xf32> to vector<1x1x128xf32>
    tpu.vector_store %arg3[%c5_57, %c0_58, %c0_59], %89 {strides = array<i32>} : memref<19x1x128xf32, #tpu.memory_space<vmem>>, vector<1x1x128xf32>,
    %c6 = arith.constant 6 : index
    %c0_60 = arith.constant 0 : index
    %c0_61 = arith.constant 0 : index
    %90 = vector.load %arg3[%c6, %c0_60, %c0_61] : memref<19x1x128xf32, #tpu.memory_space<vmem>>, vector<1x1x128xf32>
    %91 = vector.shape_cast %90 : vector<1x1x128xf32> to vector<1x128xf32>
    %cst_62 = arith.constant 0.000000e+00 : f32
    %92 = vector.broadcast %cst_62 : f32 to vector<8x128xf32>
    %93 = arith.select %68, %4, %92 : vector<8x128xi1>, vector<8x128xf32>
    %cst_63 = arith.constant dense<0.000000e+00> : vector<128xf32>
    %94 = vector.multi_reduction <add>, %93, %cst_63 [0] : vector<8x128xf32> to vector<128xf32>
    %95 = vector.shape_cast %94 : vector<128xf32> to vector<1x128xf32>
    %96 = arith.addf %91, %95 : vector<1x128xf32>
    %c6_64 = arith.constant 6 : index
    %c0_65 = arith.constant 0 : index
    %c0_66 = arith.constant 0 : index
    %97 = vector.load %arg3[%c6_64, %c0_65, %c0_66] : memref<19x1x128xf32, #tpu.memory_space<vmem>>, vector<1x1x128xf32>
    %98 = vector.shape_cast %97 : vector<1x1x128xf32> to vector<1x128xf32>
    %99 = vector.shape_cast %96 : vector<1x128xf32> to vector<1x1x128xf32>
    tpu.vector_store %arg3[%c6_64, %c0_65, %c0_66], %99 {strides = array<i32>} : memref<19x1x128xf32, #tpu.memory_space<vmem>>, vector<1x1x128xf32>,
    %cst_67 = arith.constant 2.000000e+00 : f32
    %100 = vector.broadcast %cst_67 : f32 to vector<8x128xf32>
    %101 = arith.cmpf oeq, %33, %100 : vector<8x128xf32>
    %c7 = arith.constant 7 : index
    %c0_68 = arith.constant 0 : index
    %c0_69 = arith.constant 0 : index
    %102 = vector.load %arg3[%c7, %c0_68, %c0_69] : memref<19x1x128xf32, #tpu.memory_space<vmem>>, vector<1x1x128xf32>
    %103 = vector.shape_cast %102 : vector<1x1x128xf32> to vector<1x128xf32>
    %cst_70 = arith.constant 1.000000e+00 : f32
    %cst_71 = arith.constant 0.000000e+00 : f32
    %104 = vector.broadcast %cst_70 : f32 to vector<8x128xf32>
    %105 = vector.broadcast %cst_71 : f32 to vector<8x128xf32>
    %106 = arith.select %101, %104, %105 : vector<8x128xi1>, vector<8x128xf32>
    %cst_72 = arith.constant dense<0.000000e+00> : vector<128xf32>
    %107 = vector.multi_reduction <add>, %106, %cst_72 [0] : vector<8x128xf32> to vector<128xf32>
    %108 = vector.shape_cast %107 : vector<128xf32> to vector<1x128xf32>
    %109 = arith.addf %103, %108 : vector<1x128xf32>
    %c7_73 = arith.constant 7 : index
    %c0_74 = arith.constant 0 : index
    %c0_75 = arith.constant 0 : index
    %110 = vector.load %arg3[%c7_73, %c0_74, %c0_75] : memref<19x1x128xf32, #tpu.memory_space<vmem>>, vector<1x1x128xf32>
    %111 = vector.shape_cast %110 : vector<1x1x128xf32> to vector<1x128xf32>
    %112 = vector.shape_cast %109 : vector<1x128xf32> to vector<1x1x128xf32>
    tpu.vector_store %arg3[%c7_73, %c0_74, %c0_75], %112 {strides = array<i32>} : memref<19x1x128xf32, #tpu.memory_space<vmem>>, vector<1x1x128xf32>,
    %c8 = arith.constant 8 : index
    %c0_76 = arith.constant 0 : index
    %c0_77 = arith.constant 0 : index
    %113 = vector.load %arg3[%c8, %c0_76, %c0_77] : memref<19x1x128xf32, #tpu.memory_space<vmem>>, vector<1x1x128xf32>
    %114 = vector.shape_cast %113 : vector<1x1x128xf32> to vector<1x128xf32>
    %cst_78 = arith.constant 0.000000e+00 : f32
    %115 = vector.broadcast %cst_78 : f32 to vector<8x128xf32>
    %116 = arith.select %101, %8, %115 : vector<8x128xi1>, vector<8x128xf32>
    %cst_79 = arith.constant dense<0.000000e+00> : vector<128xf32>
    %117 = vector.multi_reduction <add>, %116, %cst_79 [0] : vector<8x128xf32> to vector<128xf32>
    %118 = vector.shape_cast %117 : vector<128xf32> to vector<1x128xf32>
    %119 = arith.addf %114, %118 : vector<1x128xf32>
    %c8_80 = arith.constant 8 : index
    %c0_81 = arith.constant 0 : index
    %c0_82 = arith.constant 0 : index
    %120 = vector.load %arg3[%c8_80, %c0_81, %c0_82] : memref<19x1x128xf32, #tpu.memory_space<vmem>>, vector<1x1x128xf32>
    %121 = vector.shape_cast %120 : vector<1x1x128xf32> to vector<1x128xf32>
    %122 = vector.shape_cast %119 : vector<1x128xf32> to vector<1x1x128xf32>
    tpu.vector_store %arg3[%c8_80, %c0_81, %c0_82], %122 {strides = array<i32>} : memref<19x1x128xf32, #tpu.memory_space<vmem>>, vector<1x1x128xf32>,
    %c9 = arith.constant 9 : index
    %c0_83 = arith.constant 0 : index
    %c0_84 = arith.constant 0 : index
    %123 = vector.load %arg3[%c9, %c0_83, %c0_84] : memref<19x1x128xf32, #tpu.memory_space<vmem>>, vector<1x1x128xf32>
    %124 = vector.shape_cast %123 : vector<1x1x128xf32> to vector<1x128xf32>
    %cst_85 = arith.constant 0.000000e+00 : f32
    %125 = vector.broadcast %cst_85 : f32 to vector<8x128xf32>
    %126 = arith.select %101, %4, %125 : vector<8x128xi1>, vector<8x128xf32>
    %cst_86 = arith.constant dense<0.000000e+00> : vector<128xf32>
    %127 = vector.multi_reduction <add>, %126, %cst_86 [0] : vector<8x128xf32> to vector<128xf32>
    %128 = vector.shape_cast %127 : vector<128xf32> to vector<1x128xf32>
    %129 = arith.addf %124, %128 : vector<1x128xf32>
    %c9_87 = arith.constant 9 : index
    %c0_88 = arith.constant 0 : index
    %c0_89 = arith.constant 0 : index
    %130 = vector.load %arg3[%c9_87, %c0_88, %c0_89] : memref<19x1x128xf32, #tpu.memory_space<vmem>>, vector<1x1x128xf32>
    %131 = vector.shape_cast %130 : vector<1x1x128xf32> to vector<1x128xf32>
    %132 = vector.shape_cast %129 : vector<1x128xf32> to vector<1x1x128xf32>
    tpu.vector_store %arg3[%c9_87, %c0_88, %c0_89], %132 {strides = array<i32>} : memref<19x1x128xf32, #tpu.memory_space<vmem>>, vector<1x1x128xf32>,
    %cst_90 = arith.constant 3.000000e+00 : f32
    %133 = vector.broadcast %cst_90 : f32 to vector<8x128xf32>
    %134 = arith.cmpf oeq, %33, %133 : vector<8x128xf32>
    %c10 = arith.constant 10 : index
    %c0_91 = arith.constant 0 : index
    %c0_92 = arith.constant 0 : index
    %135 = vector.load %arg3[%c10, %c0_91, %c0_92] : memref<19x1x128xf32, #tpu.memory_space<vmem>>, vector<1x1x128xf32>
    %136 = vector.shape_cast %135 : vector<1x1x128xf32> to vector<1x128xf32>
    %cst_93 = arith.constant 1.000000e+00 : f32
    %cst_94 = arith.constant 0.000000e+00 : f32
    %137 = vector.broadcast %cst_93 : f32 to vector<8x128xf32>
    %138 = vector.broadcast %cst_94 : f32 to vector<8x128xf32>
    %139 = arith.select %134, %137, %138 : vector<8x128xi1>, vector<8x128xf32>
    %cst_95 = arith.constant dense<0.000000e+00> : vector<128xf32>
    %140 = vector.multi_reduction <add>, %139, %cst_95 [0] : vector<8x128xf32> to vector<128xf32>
    %141 = vector.shape_cast %140 : vector<128xf32> to vector<1x128xf32>
    %142 = arith.addf %136, %141 : vector<1x128xf32>
    %c10_96 = arith.constant 10 : index
    %c0_97 = arith.constant 0 : index
    %c0_98 = arith.constant 0 : index
    %143 = vector.load %arg3[%c10_96, %c0_97, %c0_98] : memref<19x1x128xf32, #tpu.memory_space<vmem>>, vector<1x1x128xf32>
    %144 = vector.shape_cast %143 : vector<1x1x128xf32> to vector<1x128xf32>
    %145 = vector.shape_cast %142 : vector<1x128xf32> to vector<1x1x128xf32>
    tpu.vector_store %arg3[%c10_96, %c0_97, %c0_98], %145 {strides = array<i32>} : memref<19x1x128xf32, #tpu.memory_space<vmem>>, vector<1x1x128xf32>,
    %c11 = arith.constant 11 : index
    %c0_99 = arith.constant 0 : index
    %c0_100 = arith.constant 0 : index
    %146 = vector.load %arg3[%c11, %c0_99, %c0_100] : memref<19x1x128xf32, #tpu.memory_space<vmem>>, vector<1x1x128xf32>
    %147 = vector.shape_cast %146 : vector<1x1x128xf32> to vector<1x128xf32>
    %cst_101 = arith.constant 0.000000e+00 : f32
    %148 = vector.broadcast %cst_101 : f32 to vector<8x128xf32>
    %149 = arith.select %134, %8, %148 : vector<8x128xi1>, vector<8x128xf32>
    %cst_102 = arith.constant dense<0.000000e+00> : vector<128xf32>
    %150 = vector.multi_reduction <add>, %149, %cst_102 [0] : vector<8x128xf32> to vector<128xf32>
    %151 = vector.shape_cast %150 : vector<128xf32> to vector<1x128xf32>
    %152 = arith.addf %147, %151 : vector<1x128xf32>
    %c11_103 = arith.constant 11 : index
    %c0_104 = arith.constant 0 : index
    %c0_105 = arith.constant 0 : index
    %153 = vector.load %arg3[%c11_103, %c0_104, %c0_105] : memref<19x1x128xf32, #tpu.memory_space<vmem>>, vector<1x1x128xf32>
    %154 = vector.shape_cast %153 : vector<1x1x128xf32> to vector<1x128xf32>
    %155 = vector.shape_cast %152 : vector<1x128xf32> to vector<1x1x128xf32>
    tpu.vector_store %arg3[%c11_103, %c0_104, %c0_105], %155 {strides = array<i32>} : memref<19x1x128xf32, #tpu.memory_space<vmem>>, vector<1x1x128xf32>,
    %c12 = arith.constant 12 : index
    %c0_106 = arith.constant 0 : index
    %c0_107 = arith.constant 0 : index
    %156 = vector.load %arg3[%c12, %c0_106, %c0_107] : memref<19x1x128xf32, #tpu.memory_space<vmem>>, vector<1x1x128xf32>
    %157 = vector.shape_cast %156 : vector<1x1x128xf32> to vector<1x128xf32>
    %cst_108 = arith.constant 0.000000e+00 : f32
    %158 = vector.broadcast %cst_108 : f32 to vector<8x128xf32>
    %159 = arith.select %134, %4, %158 : vector<8x128xi1>, vector<8x128xf32>
    %cst_109 = arith.constant dense<0.000000e+00> : vector<128xf32>
    %160 = vector.multi_reduction <add>, %159, %cst_109 [0] : vector<8x128xf32> to vector<128xf32>
    %161 = vector.shape_cast %160 : vector<128xf32> to vector<1x128xf32>
    %162 = arith.addf %157, %161 : vector<1x128xf32>
    %c12_110 = arith.constant 12 : index
    %c0_111 = arith.constant 0 : index
    %c0_112 = arith.constant 0 : index
    %163 = vector.load %arg3[%c12_110, %c0_111, %c0_112] : memref<19x1x128xf32, #tpu.memory_space<vmem>>, vector<1x1x128xf32>
    %164 = vector.shape_cast %163 : vector<1x1x128xf32> to vector<1x128xf32>
    %165 = vector.shape_cast %162 : vector<1x128xf32> to vector<1x1x128xf32>
    tpu.vector_store %arg3[%c12_110, %c0_111, %c0_112], %165 {strides = array<i32>} : memref<19x1x128xf32, #tpu.memory_space<vmem>>, vector<1x1x128xf32>,
    %cst_113 = arith.constant 4.000000e+00 : f32
    %166 = vector.broadcast %cst_113 : f32 to vector<8x128xf32>
    %167 = arith.cmpf oeq, %33, %166 : vector<8x128xf32>
    %c13 = arith.constant 13 : index
    %c0_114 = arith.constant 0 : index
    %c0_115 = arith.constant 0 : index
    %168 = vector.load %arg3[%c13, %c0_114, %c0_115] : memref<19x1x128xf32, #tpu.memory_space<vmem>>, vector<1x1x128xf32>
    %169 = vector.shape_cast %168 : vector<1x1x128xf32> to vector<1x128xf32>
    %cst_116 = arith.constant 1.000000e+00 : f32
    %cst_117 = arith.constant 0.000000e+00 : f32
    %170 = vector.broadcast %cst_116 : f32 to vector<8x128xf32>
    %171 = vector.broadcast %cst_117 : f32 to vector<8x128xf32>
    %172 = arith.select %167, %170, %171 : vector<8x128xi1>, vector<8x128xf32>
    %cst_118 = arith.constant dense<0.000000e+00> : vector<128xf32>
    %173 = vector.multi_reduction <add>, %172, %cst_118 [0] : vector<8x128xf32> to vector<128xf32>
    %174 = vector.shape_cast %173 : vector<128xf32> to vector<1x128xf32>
    %175 = arith.addf %169, %174 : vector<1x128xf32>
    %c13_119 = arith.constant 13 : index
    %c0_120 = arith.constant 0 : index
    %c0_121 = arith.constant 0 : index
    %176 = vector.load %arg3[%c13_119, %c0_120, %c0_121] : memref<19x1x128xf32, #tpu.memory_space<vmem>>, vector<1x1x128xf32>
    %177 = vector.shape_cast %176 : vector<1x1x128xf32> to vector<1x128xf32>
    %178 = vector.shape_cast %175 : vector<1x128xf32> to vector<1x1x128xf32>
    tpu.vector_store %arg3[%c13_119, %c0_120, %c0_121], %178 {strides = array<i32>} : memref<19x1x128xf32, #tpu.memory_space<vmem>>, vector<1x1x128xf32>,
    %c14 = arith.constant 14 : index
    %c0_122 = arith.constant 0 : index
    %c0_123 = arith.constant 0 : index
    %179 = vector.load %arg3[%c14, %c0_122, %c0_123] : memref<19x1x128xf32, #tpu.memory_space<vmem>>, vector<1x1x128xf32>
    %180 = vector.shape_cast %179 : vector<1x1x128xf32> to vector<1x128xf32>
    %cst_124 = arith.constant 0.000000e+00 : f32
    %181 = vector.broadcast %cst_124 : f32 to vector<8x128xf32>
    %182 = arith.select %167, %8, %181 : vector<8x128xi1>, vector<8x128xf32>
    %cst_125 = arith.constant dense<0.000000e+00> : vector<128xf32>
    %183 = vector.multi_reduction <add>, %182, %cst_125 [0] : vector<8x128xf32> to vector<128xf32>
    %184 = vector.shape_cast %183 : vector<128xf32> to vector<1x128xf32>
    %185 = arith.addf %180, %184 : vector<1x128xf32>
    %c14_126 = arith.constant 14 : index
    %c0_127 = arith.constant 0 : index
    %c0_128 = arith.constant 0 : index
    %186 = vector.load %arg3[%c14_126, %c0_127, %c0_128] : memref<19x1x128xf32, #tpu.memory_space<vmem>>, vector<1x1x128xf32>
    %187 = vector.shape_cast %186 : vector<1x1x128xf32> to vector<1x128xf32>
    %188 = vector.shape_cast %185 : vector<1x128xf32> to vector<1x1x128xf32>
    tpu.vector_store %arg3[%c14_126, %c0_127, %c0_128], %188 {strides = array<i32>} : memref<19x1x128xf32, #tpu.memory_space<vmem>>, vector<1x1x128xf32>,
    %c15 = arith.constant 15 : index
    %c0_129 = arith.constant 0 : index
    %c0_130 = arith.constant 0 : index
    %189 = vector.load %arg3[%c15, %c0_129, %c0_130] : memref<19x1x128xf32, #tpu.memory_space<vmem>>, vector<1x1x128xf32>
    %190 = vector.shape_cast %189 : vector<1x1x128xf32> to vector<1x128xf32>
    %cst_131 = arith.constant 0.000000e+00 : f32
    %191 = vector.broadcast %cst_131 : f32 to vector<8x128xf32>
    %192 = arith.select %167, %4, %191 : vector<8x128xi1>, vector<8x128xf32>
    %cst_132 = arith.constant dense<0.000000e+00> : vector<128xf32>
    %193 = vector.multi_reduction <add>, %192, %cst_132 [0] : vector<8x128xf32> to vector<128xf32>
    %194 = vector.shape_cast %193 : vector<128xf32> to vector<1x128xf32>
    %195 = arith.addf %190, %194 : vector<1x128xf32>
    %c15_133 = arith.constant 15 : index
    %c0_134 = arith.constant 0 : index
    %c0_135 = arith.constant 0 : index
    %196 = vector.load %arg3[%c15_133, %c0_134, %c0_135] : memref<19x1x128xf32, #tpu.memory_space<vmem>>, vector<1x1x128xf32>
    %197 = vector.shape_cast %196 : vector<1x1x128xf32> to vector<1x128xf32>
    %198 = vector.shape_cast %195 : vector<1x128xf32> to vector<1x1x128xf32>
    tpu.vector_store %arg3[%c15_133, %c0_134, %c0_135], %198 {strides = array<i32>} : memref<19x1x128xf32, #tpu.memory_space<vmem>>, vector<1x1x128xf32>,
    %cst_136 = arith.constant 5.000000e+00 : f32
    %199 = vector.broadcast %cst_136 : f32 to vector<8x128xf32>
    %200 = arith.cmpf oeq, %33, %199 : vector<8x128xf32>
    %c16 = arith.constant 16 : index
    %c0_137 = arith.constant 0 : index
    %c0_138 = arith.constant 0 : index
    %201 = vector.load %arg3[%c16, %c0_137, %c0_138] : memref<19x1x128xf32, #tpu.memory_space<vmem>>, vector<1x1x128xf32>
    %202 = vector.shape_cast %201 : vector<1x1x128xf32> to vector<1x128xf32>
    %cst_139 = arith.constant 1.000000e+00 : f32
    %cst_140 = arith.constant 0.000000e+00 : f32
    %203 = vector.broadcast %cst_139 : f32 to vector<8x128xf32>
    %204 = vector.broadcast %cst_140 : f32 to vector<8x128xf32>
    %205 = arith.select %200, %203, %204 : vector<8x128xi1>, vector<8x128xf32>
    %cst_141 = arith.constant dense<0.000000e+00> : vector<128xf32>
    %206 = vector.multi_reduction <add>, %205, %cst_141 [0] : vector<8x128xf32> to vector<128xf32>
    %207 = vector.shape_cast %206 : vector<128xf32> to vector<1x128xf32>
    %208 = arith.addf %202, %207 : vector<1x128xf32>
    %c16_142 = arith.constant 16 : index
    %c0_143 = arith.constant 0 : index
    %c0_144 = arith.constant 0 : index
    %209 = vector.load %arg3[%c16_142, %c0_143, %c0_144] : memref<19x1x128xf32, #tpu.memory_space<vmem>>, vector<1x1x128xf32>
    %210 = vector.shape_cast %209 : vector<1x1x128xf32> to vector<1x128xf32>
    %211 = vector.shape_cast %208 : vector<1x128xf32> to vector<1x1x128xf32>
    tpu.vector_store %arg3[%c16_142, %c0_143, %c0_144], %211 {strides = array<i32>} : memref<19x1x128xf32, #tpu.memory_space<vmem>>, vector<1x1x128xf32>,
    %c17 = arith.constant 17 : index
    %c0_145 = arith.constant 0 : index
    %c0_146 = arith.constant 0 : index
    %212 = vector.load %arg3[%c17, %c0_145, %c0_146] : memref<19x1x128xf32, #tpu.memory_space<vmem>>, vector<1x1x128xf32>
    %213 = vector.shape_cast %212 : vector<1x1x128xf32> to vector<1x128xf32>
    %cst_147 = arith.constant 0.000000e+00 : f32
    %214 = vector.broadcast %cst_147 : f32 to vector<8x128xf32>
    %215 = arith.select %200, %8, %214 : vector<8x128xi1>, vector<8x128xf32>
    %cst_148 = arith.constant dense<0.000000e+00> : vector<128xf32>
    %216 = vector.multi_reduction <add>, %215, %cst_148 [0] : vector<8x128xf32> to vector<128xf32>
    %217 = vector.shape_cast %216 : vector<128xf32> to vector<1x128xf32>
    %218 = arith.addf %213, %217 : vector<1x128xf32>
    %c17_149 = arith.constant 17 : index
    %c0_150 = arith.constant 0 : index
    %c0_151 = arith.constant 0 : index
    %219 = vector.load %arg3[%c17_149, %c0_150, %c0_151] : memref<19x1x128xf32, #tpu.memory_space<vmem>>, vector<1x1x128xf32>
    %220 = vector.shape_cast %219 : vector<1x1x128xf32> to vector<1x128xf32>
    %221 = vector.shape_cast %218 : vector<1x128xf32> to vector<1x1x128xf32>
    tpu.vector_store %arg3[%c17_149, %c0_150, %c0_151], %221 {strides = array<i32>} : memref<19x1x128xf32, #tpu.memory_space<vmem>>, vector<1x1x128xf32>,
    %c18 = arith.constant 18 : index
    %c0_152 = arith.constant 0 : index
    %c0_153 = arith.constant 0 : index
    %222 = vector.load %arg3[%c18, %c0_152, %c0_153] : memref<19x1x128xf32, #tpu.memory_space<vmem>>, vector<1x1x128xf32>
    %223 = vector.shape_cast %222 : vector<1x1x128xf32> to vector<1x128xf32>
    %cst_154 = arith.constant 0.000000e+00 : f32
    %224 = vector.broadcast %cst_154 : f32 to vector<8x128xf32>
    %225 = arith.select %200, %4, %224 : vector<8x128xi1>, vector<8x128xf32>
    %cst_155 = arith.constant dense<0.000000e+00> : vector<128xf32>
    %226 = vector.multi_reduction <add>, %225, %cst_155 [0] : vector<8x128xf32> to vector<128xf32>
    %227 = vector.shape_cast %226 : vector<128xf32> to vector<1x128xf32>
    %228 = arith.addf %223, %227 : vector<1x128xf32>
    %c18_156 = arith.constant 18 : index
    %c0_157 = arith.constant 0 : index
    %c0_158 = arith.constant 0 : index
    %229 = vector.load %arg3[%c18_156, %c0_157, %c0_158] : memref<19x1x128xf32, #tpu.memory_space<vmem>>, vector<1x1x128xf32>
    %230 = vector.shape_cast %229 : vector<1x1x128xf32> to vector<1x128xf32>
    %231 = vector.shape_cast %228 : vector<1x128xf32> to vector<1x1x128xf32>
    tpu.vector_store %arg3[%c18_156, %c0_157, %c0_158], %231 {strides = array<i32>} : memref<19x1x128xf32, #tpu.memory_space<vmem>>, vector<1x1x128xf32>,
    %c0_i32_159 = arith.constant 0 : i32
    %232 = arith.cmpi eq, %arg0, %c0_i32_159 : i32
    %233 = arith.extui %232 : i1 to i32
    %c0_i32_160 = arith.constant 0 : i32
    %234 = arith.cmpi ne, %233, %c0_i32_160 : i32
    scf.if %234 {
      %c0_161 = arith.constant 0 : index
      %c0_162 = arith.constant 0 : index
      %c0_163 = arith.constant 0 : index
      %235 = vector.load %arg3[%c0_161, %c0_162, %c0_163] : memref<19x1x128xf32, #tpu.memory_space<vmem>>, vector<1x1x128xf32>
      %236 = vector.shape_cast %235 : vector<1x1x128xf32> to vector<1x128xf32>
      %cst_164 = arith.constant dense<0.000000e+00> : vector<1xf32>
      %237 = vector.multi_reduction <add>, %236, %cst_164 [1] : vector<1x128xf32> to vector<1xf32>
      %238 = vector.shape_cast %237 : vector<1xf32> to vector<1x1xf32>
      %cst_165 = arith.constant 8.000000e+00 : f32
      %239 = vector.broadcast %cst_165 : f32 to vector<1x1xf32>
      %240 = arith.divf %238, %239 : vector<1x1xf32>
      %c1_166 = arith.constant 1 : index
      %c0_167 = arith.constant 0 : index
      %c0_168 = arith.constant 0 : index
      %241 = vector.load %arg3[%c1_166, %c0_167, %c0_168] : memref<19x1x128xf32, #tpu.memory_space<vmem>>, vector<1x1x128xf32>
      %242 = vector.shape_cast %241 : vector<1x1x128xf32> to vector<1x128xf32>
      %cst_169 = arith.constant dense<0.000000e+00> : vector<1xf32>
      %243 = vector.multi_reduction <add>, %242, %cst_169 [1] : vector<1x128xf32> to vector<1xf32>
      %244 = vector.shape_cast %243 : vector<1xf32> to vector<1x1xf32>
      %c2_170 = arith.constant 2 : index
      %c0_171 = arith.constant 0 : index
      %c0_172 = arith.constant 0 : index
      %245 = vector.load %arg3[%c2_170, %c0_171, %c0_172] : memref<19x1x128xf32, #tpu.memory_space<vmem>>, vector<1x1x128xf32>
      %246 = vector.shape_cast %245 : vector<1x1x128xf32> to vector<1x128xf32>
      %cst_173 = arith.constant dense<0.000000e+00> : vector<1xf32>
      %247 = vector.multi_reduction <add>, %246, %cst_173 [1] : vector<1x128xf32> to vector<1xf32>
      %248 = vector.shape_cast %247 : vector<1xf32> to vector<1x1xf32>
      %c3_174 = arith.constant 3 : index
      %c0_175 = arith.constant 0 : index
      %c0_176 = arith.constant 0 : index
      %249 = vector.load %arg3[%c3_174, %c0_175, %c0_176] : memref<19x1x128xf32, #tpu.memory_space<vmem>>, vector<1x1x128xf32>
      %250 = vector.shape_cast %249 : vector<1x1x128xf32> to vector<1x128xf32>
      %cst_177 = arith.constant dense<0.000000e+00> : vector<1xf32>
      %251 = vector.multi_reduction <add>, %250, %cst_177 [1] : vector<1x128xf32> to vector<1xf32>
      %252 = vector.shape_cast %251 : vector<1xf32> to vector<1x1xf32>
      %cst_178 = arith.constant 0.000000e+00 : f32
      %253 = vector.broadcast %cst_178 : f32 to vector<1x1xf32>
      %254 = arith.cmpf ogt, %244, %253 : vector<1x1xf32>
      %cst_179 = arith.constant 1.000000e+00 : f32
      %255 = vector.broadcast %cst_179 : f32 to vector<1x1xf32>
      %256 = arith.maximumf %244, %255 : vector<1x1xf32>
      %257 = arith.divf %248, %256 : vector<1x1xf32>
      %cst_180 = arith.constant 0.000000e+00 : f32
      %258 = vector.broadcast %cst_180 : f32 to vector<1x1xf32>
      %259 = arith.select %254, %257, %258 : vector<1x1xi1>, vector<1x1xf32>
      %260 = arith.divf %252, %256 : vector<1x1xf32>
      %cst_181 = arith.constant 0.000000e+00 : f32
      %261 = vector.broadcast %cst_181 : f32 to vector<1x1xf32>
      %262 = arith.select %254, %260, %261 : vector<1x1xi1>, vector<1x1xf32>
      %c4_182 = arith.constant 4 : index
      %c0_183 = arith.constant 0 : index
      %c0_184 = arith.constant 0 : index
      %263 = vector.load %arg3[%c4_182, %c0_183, %c0_184] : memref<19x1x128xf32, #tpu.memory_space<vmem>>, vector<1x1x128xf32>
      %264 = vector.shape_cast %263 : vector<1x1x128xf32> to vector<1x128xf32>
      %cst_185 = arith.constant dense<0.000000e+00> : vector<1xf32>
      %265 = vector.multi_reduction <add>, %264, %cst_185 [1] : vector<1x128xf32> to vector<1xf32>
      %266 = vector.shape_cast %265 : vector<1xf32> to vector<1x1xf32>
      %c5_186 = arith.constant 5 : index
      %c0_187 = arith.constant 0 : index
      %c0_188 = arith.constant 0 : index
      %267 = vector.load %arg3[%c5_186, %c0_187, %c0_188] : memref<19x1x128xf32, #tpu.memory_space<vmem>>, vector<1x1x128xf32>
      %268 = vector.shape_cast %267 : vector<1x1x128xf32> to vector<1x128xf32>
      %cst_189 = arith.constant dense<0.000000e+00> : vector<1xf32>
      %269 = vector.multi_reduction <add>, %268, %cst_189 [1] : vector<1x128xf32> to vector<1xf32>
      %270 = vector.shape_cast %269 : vector<1xf32> to vector<1x1xf32>
      %c6_190 = arith.constant 6 : index
      %c0_191 = arith.constant 0 : index
      %c0_192 = arith.constant 0 : index
      %271 = vector.load %arg3[%c6_190, %c0_191, %c0_192] : memref<19x1x128xf32, #tpu.memory_space<vmem>>, vector<1x1x128xf32>
      %272 = vector.shape_cast %271 : vector<1x1x128xf32> to vector<1x128xf32>
      %cst_193 = arith.constant dense<0.000000e+00> : vector<1xf32>
      %273 = vector.multi_reduction <add>, %272, %cst_193 [1] : vector<1x128xf32> to vector<1xf32>
      %274 = vector.shape_cast %273 : vector<1xf32> to vector<1x1xf32>
      %cst_194 = arith.constant 0.000000e+00 : f32
      %275 = vector.broadcast %cst_194 : f32 to vector<1x1xf32>
      %276 = arith.cmpf ogt, %266, %275 : vector<1x1xf32>
      %cst_195 = arith.constant 1.000000e+00 : f32
      %277 = vector.broadcast %cst_195 : f32 to vector<1x1xf32>
      %278 = arith.maximumf %266, %277 : vector<1x1xf32>
      %279 = arith.divf %270, %278 : vector<1x1xf32>
      %cst_196 = arith.constant 0.000000e+00 : f32
      %280 = vector.broadcast %cst_196 : f32 to vector<1x1xf32>
      %281 = arith.select %276, %279, %280 : vector<1x1xi1>, vector<1x1xf32>
      %282 = arith.divf %274, %278 : vector<1x1xf32>
      %cst_197 = arith.constant 0.000000e+00 : f32
      %283 = vector.broadcast %cst_197 : f32 to vector<1x1xf32>
      %284 = arith.select %276, %282, %283 : vector<1x1xi1>, vector<1x1xf32>
      %c7_198 = arith.constant 7 : index
      %c0_199 = arith.constant 0 : index
      %c0_200 = arith.constant 0 : index
      %285 = vector.load %arg3[%c7_198, %c0_199, %c0_200] : memref<19x1x128xf32, #tpu.memory_space<vmem>>, vector<1x1x128xf32>
      %286 = vector.shape_cast %285 : vector<1x1x128xf32> to vector<1x128xf32>
      %cst_201 = arith.constant dense<0.000000e+00> : vector<1xf32>
      %287 = vector.multi_reduction <add>, %286, %cst_201 [1] : vector<1x128xf32> to vector<1xf32>
      %288 = vector.shape_cast %287 : vector<1xf32> to vector<1x1xf32>
      %c8_202 = arith.constant 8 : index
      %c0_203 = arith.constant 0 : index
      %c0_204 = arith.constant 0 : index
      %289 = vector.load %arg3[%c8_202, %c0_203, %c0_204] : memref<19x1x128xf32, #tpu.memory_space<vmem>>, vector<1x1x128xf32>
      %290 = vector.shape_cast %289 : vector<1x1x128xf32> to vector<1x128xf32>
      %cst_205 = arith.constant dense<0.000000e+00> : vector<1xf32>
      %291 = vector.multi_reduction <add>, %290, %cst_205 [1] : vector<1x128xf32> to vector<1xf32>
      %292 = vector.shape_cast %291 : vector<1xf32> to vector<1x1xf32>
      %c9_206 = arith.constant 9 : index
      %c0_207 = arith.constant 0 : index
      %c0_208 = arith.constant 0 : index
      %293 = vector.load %arg3[%c9_206, %c0_207, %c0_208] : memref<19x1x128xf32, #tpu.memory_space<vmem>>, vector<1x1x128xf32>
      %294 = vector.shape_cast %293 : vector<1x1x128xf32> to vector<1x128xf32>
      %cst_209 = arith.constant dense<0.000000e+00> : vector<1xf32>
      %295 = vector.multi_reduction <add>, %294, %cst_209 [1] : vector<1x128xf32> to vector<1xf32>
      %296 = vector.shape_cast %295 : vector<1xf32> to vector<1x1xf32>
      %cst_210 = arith.constant 0.000000e+00 : f32
      %297 = vector.broadcast %cst_210 : f32 to vector<1x1xf32>
      %298 = arith.cmpf ogt, %288, %297 : vector<1x1xf32>
      %cst_211 = arith.constant 1.000000e+00 : f32
      %299 = vector.broadcast %cst_211 : f32 to vector<1x1xf32>
      %300 = arith.maximumf %288, %299 : vector<1x1xf32>
      %301 = arith.divf %292, %300 : vector<1x1xf32>
      %cst_212 = arith.constant 0.000000e+00 : f32
      %302 = vector.broadcast %cst_212 : f32 to vector<1x1xf32>
      %303 = arith.select %298, %301, %302 : vector<1x1xi1>, vector<1x1xf32>
      %304 = arith.divf %296, %300 : vector<1x1xf32>
      %cst_213 = arith.constant 0.000000e+00 : f32
      %305 = vector.broadcast %cst_213 : f32 to vector<1x1xf32>
      %306 = arith.select %298, %304, %305 : vector<1x1xi1>, vector<1x1xf32>
      %c10_214 = arith.constant 10 : index
      %c0_215 = arith.constant 0 : index
      %c0_216 = arith.constant 0 : index
      %307 = vector.load %arg3[%c10_214, %c0_215, %c0_216] : memref<19x1x128xf32, #tpu.memory_space<vmem>>, vector<1x1x128xf32>
      %308 = vector.shape_cast %307 : vector<1x1x128xf32> to vector<1x128xf32>
      %cst_217 = arith.constant dense<0.000000e+00> : vector<1xf32>
      %309 = vector.multi_reduction <add>, %308, %cst_217 [1] : vector<1x128xf32> to vector<1xf32>
      %310 = vector.shape_cast %309 : vector<1xf32> to vector<1x1xf32>
      %c11_218 = arith.constant 11 : index
      %c0_219 = arith.constant 0 : index
      %c0_220 = arith.constant 0 : index
      %311 = vector.load %arg3[%c11_218, %c0_219, %c0_220] : memref<19x1x128xf32, #tpu.memory_space<vmem>>, vector<1x1x128xf32>
      %312 = vector.shape_cast %311 : vector<1x1x128xf32> to vector<1x128xf32>
      %cst_221 = arith.constant dense<0.000000e+00> : vector<1xf32>
      %313 = vector.multi_reduction <add>, %312, %cst_221 [1] : vector<1x128xf32> to vector<1xf32>
      %314 = vector.shape_cast %313 : vector<1xf32> to vector<1x1xf32>
      %c12_222 = arith.constant 12 : index
      %c0_223 = arith.constant 0 : index
      %c0_224 = arith.constant 0 : index
      %315 = vector.load %arg3[%c12_222, %c0_223, %c0_224] : memref<19x1x128xf32, #tpu.memory_space<vmem>>, vector<1x1x128xf32>
      %316 = vector.shape_cast %315 : vector<1x1x128xf32> to vector<1x128xf32>
      %cst_225 = arith.constant dense<0.000000e+00> : vector<1xf32>
      %317 = vector.multi_reduction <add>, %316, %cst_225 [1] : vector<1x128xf32> to vector<1xf32>
      %318 = vector.shape_cast %317 : vector<1xf32> to vector<1x1xf32>
      %cst_226 = arith.constant 0.000000e+00 : f32
      %319 = vector.broadcast %cst_226 : f32 to vector<1x1xf32>
      %320 = arith.cmpf ogt, %310, %319 : vector<1x1xf32>
      %cst_227 = arith.constant 1.000000e+00 : f32
      %321 = vector.broadcast %cst_227 : f32 to vector<1x1xf32>
      %322 = arith.maximumf %310, %321 : vector<1x1xf32>
      %323 = arith.divf %314, %322 : vector<1x1xf32>
      %cst_228 = arith.constant 0.000000e+00 : f32
      %324 = vector.broadcast %cst_228 : f32 to vector<1x1xf32>
      %325 = arith.select %320, %323, %324 : vector<1x1xi1>, vector<1x1xf32>
      %326 = arith.divf %318, %322 : vector<1x1xf32>
      %cst_229 = arith.constant 0.000000e+00 : f32
      %327 = vector.broadcast %cst_229 : f32 to vector<1x1xf32>
      %328 = arith.select %320, %326, %327 : vector<1x1xi1>, vector<1x1xf32>
      %c13_230 = arith.constant 13 : index
      %c0_231 = arith.constant 0 : index
      %c0_232 = arith.constant 0 : index
      %329 = vector.load %arg3[%c13_230, %c0_231, %c0_232] : memref<19x1x128xf32, #tpu.memory_space<vmem>>, vector<1x1x128xf32>
      %330 = vector.shape_cast %329 : vector<1x1x128xf32> to vector<1x128xf32>
      %cst_233 = arith.constant dense<0.000000e+00> : vector<1xf32>
      %331 = vector.multi_reduction <add>, %330, %cst_233 [1] : vector<1x128xf32> to vector<1xf32>
      %332 = vector.shape_cast %331 : vector<1xf32> to vector<1x1xf32>
      %c14_234 = arith.constant 14 : index
      %c0_235 = arith.constant 0 : index
      %c0_236 = arith.constant 0 : index
      %333 = vector.load %arg3[%c14_234, %c0_235, %c0_236] : memref<19x1x128xf32, #tpu.memory_space<vmem>>, vector<1x1x128xf32>
      %334 = vector.shape_cast %333 : vector<1x1x128xf32> to vector<1x128xf32>
      %cst_237 = arith.constant dense<0.000000e+00> : vector<1xf32>
      %335 = vector.multi_reduction <add>, %334, %cst_237 [1] : vector<1x128xf32> to vector<1xf32>
      %336 = vector.shape_cast %335 : vector<1xf32> to vector<1x1xf32>
      %c15_238 = arith.constant 15 : index
      %c0_239 = arith.constant 0 : index
      %c0_240 = arith.constant 0 : index
      %337 = vector.load %arg3[%c15_238, %c0_239, %c0_240] : memref<19x1x128xf32, #tpu.memory_space<vmem>>, vector<1x1x128xf32>
      %338 = vector.shape_cast %337 : vector<1x1x128xf32> to vector<1x128xf32>
      %cst_241 = arith.constant dense<0.000000e+00> : vector<1xf32>
      %339 = vector.multi_reduction <add>, %338, %cst_241 [1] : vector<1x128xf32> to vector<1xf32>
      %340 = vector.shape_cast %339 : vector<1xf32> to vector<1x1xf32>
      %cst_242 = arith.constant 0.000000e+00 : f32
      %341 = vector.broadcast %cst_242 : f32 to vector<1x1xf32>
      %342 = arith.cmpf ogt, %332, %341 : vector<1x1xf32>
      %cst_243 = arith.constant 1.000000e+00 : f32
      %343 = vector.broadcast %cst_243 : f32 to vector<1x1xf32>
      %344 = arith.maximumf %332, %343 : vector<1x1xf32>
      %345 = arith.divf %336, %344 : vector<1x1xf32>
      %cst_244 = arith.constant 0.000000e+00 : f32
      %346 = vector.broadcast %cst_244 : f32 to vector<1x1xf32>
      %347 = arith.select %342, %345, %346 : vector<1x1xi1>, vector<1x1xf32>
      %348 = arith.divf %340, %344 : vector<1x1xf32>
      %cst_245 = arith.constant 0.000000e+00 : f32
      %349 = vector.broadcast %cst_245 : f32 to vector<1x1xf32>
      %350 = arith.select %342, %348, %349 : vector<1x1xi1>, vector<1x1xf32>
      %c16_246 = arith.constant 16 : index
      %c0_247 = arith.constant 0 : index
      %c0_248 = arith.constant 0 : index
      %351 = vector.load %arg3[%c16_246, %c0_247, %c0_248] : memref<19x1x128xf32, #tpu.memory_space<vmem>>, vector<1x1x128xf32>
      %352 = vector.shape_cast %351 : vector<1x1x128xf32> to vector<1x128xf32>
      %cst_249 = arith.constant dense<0.000000e+00> : vector<1xf32>
      %353 = vector.multi_reduction <add>, %352, %cst_249 [1] : vector<1x128xf32> to vector<1xf32>
      %354 = vector.shape_cast %353 : vector<1xf32> to vector<1x1xf32>
      %c17_250 = arith.constant 17 : index
      %c0_251 = arith.constant 0 : index
      %c0_252 = arith.constant 0 : index
      %355 = vector.load %arg3[%c17_250, %c0_251, %c0_252] : memref<19x1x128xf32, #tpu.memory_space<vmem>>, vector<1x1x128xf32>
      %356 = vector.shape_cast %355 : vector<1x1x128xf32> to vector<1x128xf32>
      %cst_253 = arith.constant dense<0.000000e+00> : vector<1xf32>
      %357 = vector.multi_reduction <add>, %356, %cst_253 [1] : vector<1x128xf32> to vector<1xf32>
      %358 = vector.shape_cast %357 : vector<1xf32> to vector<1x1xf32>
      %c18_254 = arith.constant 18 : index
      %c0_255 = arith.constant 0 : index
      %c0_256 = arith.constant 0 : index
      %359 = vector.load %arg3[%c18_254, %c0_255, %c0_256] : memref<19x1x128xf32, #tpu.memory_space<vmem>>, vector<1x1x128xf32>
      %360 = vector.shape_cast %359 : vector<1x1x128xf32> to vector<1x128xf32>
      %cst_257 = arith.constant dense<0.000000e+00> : vector<1xf32>
      %361 = vector.multi_reduction <add>, %360, %cst_257 [1] : vector<1x128xf32> to vector<1xf32>
      %362 = vector.shape_cast %361 : vector<1xf32> to vector<1x1xf32>
      %cst_258 = arith.constant 0.000000e+00 : f32
      %363 = vector.broadcast %cst_258 : f32 to vector<1x1xf32>
      %364 = arith.cmpf ogt, %354, %363 : vector<1x1xf32>
      %cst_259 = arith.constant 1.000000e+00 : f32
      %365 = vector.broadcast %cst_259 : f32 to vector<1x1xf32>
      %366 = arith.maximumf %354, %365 : vector<1x1xf32>
      %367 = arith.divf %358, %366 : vector<1x1xf32>
      %cst_260 = arith.constant 0.000000e+00 : f32
      %368 = vector.broadcast %cst_260 : f32 to vector<1x1xf32>
      %369 = arith.select %364, %367, %368 : vector<1x1xi1>, vector<1x1xf32>
      %370 = arith.divf %362, %366 : vector<1x1xf32>
      %cst_261 = arith.constant 0.000000e+00 : f32
      %371 = vector.broadcast %cst_261 : f32 to vector<1x1xf32>
      %372 = arith.select %364, %370, %371 : vector<1x1xi1>, vector<1x1xf32>
      %cst_262 = arith.constant 0.000000e+00 : f32
      %373 = vector.broadcast %cst_262 : f32 to vector<1x1xf32>
      %374 = arith.subf %259, %281 : vector<1x1xf32>
      %375 = arith.subf %262, %284 : vector<1x1xf32>
      %376 = arith.subf %374, %375 : vector<1x1xf32>
      %377 = math.absf %376 : vector<1x1xf32>
      %378 = arith.addf %373, %377 : vector<1x1xf32>
      %379 = arith.subf %259, %303 : vector<1x1xf32>
      %380 = arith.subf %262, %306 : vector<1x1xf32>
      %381 = arith.subf %379, %380 : vector<1x1xf32>
      %382 = math.absf %381 : vector<1x1xf32>
      %383 = arith.addf %378, %382 : vector<1x1xf32>
      %384 = arith.subf %259, %325 : vector<1x1xf32>
      %385 = arith.subf %262, %328 : vector<1x1xf32>
      %386 = arith.subf %384, %385 : vector<1x1xf32>
      %387 = math.absf %386 : vector<1x1xf32>
      %388 = arith.addf %383, %387 : vector<1x1xf32>
      %389 = arith.subf %259, %347 : vector<1x1xf32>
      %390 = arith.subf %262, %350 : vector<1x1xf32>
      %391 = arith.subf %389, %390 : vector<1x1xf32>
      %392 = math.absf %391 : vector<1x1xf32>
      %393 = arith.addf %388, %392 : vector<1x1xf32>
      %394 = arith.subf %259, %369 : vector<1x1xf32>
      %395 = arith.subf %262, %372 : vector<1x1xf32>
      %396 = arith.subf %394, %395 : vector<1x1xf32>
      %397 = math.absf %396 : vector<1x1xf32>
      %398 = arith.addf %393, %397 : vector<1x1xf32>
      %399 = arith.subf %281, %303 : vector<1x1xf32>
      %400 = arith.subf %284, %306 : vector<1x1xf32>
      %401 = arith.subf %399, %400 : vector<1x1xf32>
      %402 = math.absf %401 : vector<1x1xf32>
      %403 = arith.addf %398, %402 : vector<1x1xf32>
      %404 = arith.subf %281, %325 : vector<1x1xf32>
      %405 = arith.subf %284, %328 : vector<1x1xf32>
      %406 = arith.subf %404, %405 : vector<1x1xf32>
      %407 = math.absf %406 : vector<1x1xf32>
      %408 = arith.addf %403, %407 : vector<1x1xf32>
      %409 = arith.subf %281, %347 : vector<1x1xf32>
      %410 = arith.subf %284, %350 : vector<1x1xf32>
      %411 = arith.subf %409, %410 : vector<1x1xf32>
      %412 = math.absf %411 : vector<1x1xf32>
      %413 = arith.addf %408, %412 : vector<1x1xf32>
      %414 = arith.subf %281, %369 : vector<1x1xf32>
      %415 = arith.subf %284, %372 : vector<1x1xf32>
      %416 = arith.subf %414, %415 : vector<1x1xf32>
      %417 = math.absf %416 : vector<1x1xf32>
      %418 = arith.addf %413, %417 : vector<1x1xf32>
      %419 = arith.subf %303, %325 : vector<1x1xf32>
      %420 = arith.subf %306, %328 : vector<1x1xf32>
      %421 = arith.subf %419, %420 : vector<1x1xf32>
      %422 = math.absf %421 : vector<1x1xf32>
      %423 = arith.addf %418, %422 : vector<1x1xf32>
      %424 = arith.subf %303, %347 : vector<1x1xf32>
      %425 = arith.subf %306, %350 : vector<1x1xf32>
      %426 = arith.subf %424, %425 : vector<1x1xf32>
      %427 = math.absf %426 : vector<1x1xf32>
      %428 = arith.addf %423, %427 : vector<1x1xf32>
      %429 = arith.subf %303, %369 : vector<1x1xf32>
      %430 = arith.subf %306, %372 : vector<1x1xf32>
      %431 = arith.subf %429, %430 : vector<1x1xf32>
      %432 = math.absf %431 : vector<1x1xf32>
      %433 = arith.addf %428, %432 : vector<1x1xf32>
      %434 = arith.subf %325, %347 : vector<1x1xf32>
      %435 = arith.subf %328, %350 : vector<1x1xf32>
      %436 = arith.subf %434, %435 : vector<1x1xf32>
      %437 = math.absf %436 : vector<1x1xf32>
      %438 = arith.addf %433, %437 : vector<1x1xf32>
      %439 = arith.subf %325, %369 : vector<1x1xf32>
      %440 = arith.subf %328, %372 : vector<1x1xf32>
      %441 = arith.subf %439, %440 : vector<1x1xf32>
      %442 = math.absf %441 : vector<1x1xf32>
      %443 = arith.addf %438, %442 : vector<1x1xf32>
      %444 = arith.subf %347, %369 : vector<1x1xf32>
      %445 = arith.subf %350, %372 : vector<1x1xf32>
      %446 = arith.subf %444, %445 : vector<1x1xf32>
      %447 = math.absf %446 : vector<1x1xf32>
      %448 = arith.addf %443, %447 : vector<1x1xf32>
      %cst_263 = arith.constant 6.700000e-02 : f32
      %449 = vector.broadcast %cst_263 : f32 to vector<1x1xf32>
      %450 = arith.mulf %449, %448 : vector<1x1xf32>
      %cst_264 = arith.constant 4.000000e+00 : f32
      %451 = vector.broadcast %cst_264 : f32 to vector<1x1xf32>
      %452 = arith.mulf %450, %451 : vector<1x1xf32>
      %453 = arith.addf %240, %452 : vector<1x1xf32>
      %c0_265 = arith.constant 0 : index
      %c0_266 = arith.constant 0 : index
      %454 = vector.load %arg2[%c0_265, %c0_266] : memref<1x1xf32, #tpu.memory_space<vmem>>, vector<1x1xf32>
      tpu.vector_store %arg2[%c0_265, %c0_266], %453 {strides = array<i32>} : memref<1x1xf32, #tpu.memory_space<vmem>>, vector<1x1xf32>,
    } else {
    }
    return
  }
  func.func @transform_0(%arg0: i32) -> (i32, i32, i32) {
    %c0_i32 = arith.constant 0 : i32
    %c0_i32_0 = arith.constant 0 : i32
    %c0_i32_1 = arith.constant 0 : i32
    return %c0_i32, %arg0, %c0_i32_0 : i32, i32, i32
  }
  func.func @transform_1(%arg0: i32) -> (i32, i32) {
    %c0_i32 = arith.constant 0 : i32
    %c0_i32_0 = arith.constant 0 : i32
    %c0_i32_1 = arith.constant 0 : i32
    return %c0_i32, %c0_i32_0 : i32, i32
  }
}

</mosaic_0001>

<llo_original>
// kernel: tpu_custom_call.1
$region0: #{tpu_custom_call.1}
  #allocation0 [shape = 'u32[]', space=smem, size = 0x4, offset = 0x4, fixed_abs, tag = 'smem constant byte address 0x4 - core index']
  #allocation1 [shape = 'u32[144,128]{1,0:T(1,128)}', space=vmem, size = 0x12000, scoped, tag = 'internal scratch']
  #allocation2 [shape = 'f32[19,1,128]{2,1,0:T(1,128)}', space=vmem, size = 0x2600, scoped, tag = 'scratch operand']
  %s0 = inlined_call_operand.hbm [shape: f32[3,8,128], index: 0, kind: input, shape index: {}]
  %s1 = inlined_call_operand.hbm [shape: f32[1,1], index: 1, kind: output, shape index: {}]
  %s2 = sld [smem:[#allocation0]]
  $region26: #{tpu_custom_call.1} parent=0
    _
  %s4 = ssub.s32 1, %s2
  %s5 = scalar_select 0, %s4, %s2
  $region1: #{tpu_custom_call.1} parent=0
    #allocation3 [shape = 'u8[12288]{0}', space=vmem, size = 0x3000, scoped, tag = 'input window, operand 0, single buffered']
    #allocation4 [shape = 's32[1]{0}', space=sflag, size = 0x4, scoped, tag = 'scoped memory for tpu_custom_call.1']
    #allocation5 [shape = 's32[1]{0}', space=sflag, size = 0x4, scoped, tag = 'scoped memory for tpu_custom_call.1']
    #allocation6 [shape = 'u8[512]{0}', space=vmem, size = 0x400, scoped, tag = 'output window, operand 0, single buffered']
    %6 = vsyncpa [#allocation4], 0
    %7 = vsyncpa [#allocation5], 0
    // Predicated region
    $region2: #{tpu_custom_call.1} parent=1 // pred_check
      _
    $region3: #{tpu_custom_call.1} parent=1 // pred_check_branch
      %9 = sbr.rel (0) target = $region5
    $region4: #{tpu_custom_call.1} parent=1 // pred_region
      %s11 = ssub.s32 384, 384
      %12 = vsyncadd [#allocation4], %s11
      %s13 = sshll.u32 [#allocation3], 4
      %s14 = int_to_ptr.vmem [resolvable:$true] %s13
      %19 = dma.hbm_to_vmem [thread:$0]  %s0, 384, %s14, [#allocation4], 128, 128, 8
    $region5: #{tpu_custom_call.1} parent=1 // pred_fallthru
      _
    // Predicated region
    $region6: #{tpu_custom_call.1} parent=1 // pred_check
      _
    $region7: #{tpu_custom_call.1} parent=1 // pred_check_branch
      %21 = sbr.rel (0) target = $region9
    $region8: #{tpu_custom_call.1} parent=1 // pred_region
      %22 = dma.done [#allocation4], 384
    $region9: #{tpu_custom_call.1} parent=1 // pred_fallthru
      _
    %p23 = scmp.eq.s32.totalorder 0, 0
    // Predicated region
    $region10: #{tpu_custom_call.1} parent=1 // pred_check
      %p24 = pneg %p23
    $region11: #{tpu_custom_call.1} parent=1 // pred_check_branch
      %26 = sbr.rel (%p24) target = $region13
    $region12: #{tpu_custom_call.1} parent=1 // pred_region
      %27 = vst [vmem:[#allocation2] sm:$0x1] 0.0
      %28 = vst [vmem:[#allocation2 + $0x1] sm:$0x1] 0.0
      %29 = vst [vmem:[#allocation2 + $0x2] sm:$0x1] 0.0
      %30 = vst [vmem:[#allocation2 + $0x3] sm:$0x1] 0.0
      %31 = vst [vmem:[#allocation2 + $0x4] sm:$0x1] 0.0
      %32 = vst [vmem:[#allocation2 + $0x5] sm:$0x1] 0.0
      %33 = vst [vmem:[#allocation2 + $0x6] sm:$0x1] 0.0
      %34 = vst [vmem:[#allocation2 + $0x7] sm:$0x1] 0.0
      %35 = vst [vmem:[#allocation2 + $0x8] sm:$0x1] 0.0
      %36 = vst [vmem:[#allocation2 + $0x9] sm:$0x1] 0.0
      %37 = vst [vmem:[#allocation2 + $0xa] sm:$0x1] 0.0
      %38 = vst [vmem:[#allocation2 + $0xb] sm:$0x1] 0.0
      %39 = vst [vmem:[#allocation2 + $0xc] sm:$0x1] 0.0
      %40 = vst [vmem:[#allocation2 + $0xd] sm:$0x1] 0.0
      %41 = vst [vmem:[#allocation2 + $0xe] sm:$0x1] 0.0
      %42 = vst [vmem:[#allocation2 + $0xf] sm:$0x1] 0.0
      %43 = vst [vmem:[#allocation2 + $0x10] sm:$0x1] 0.0
      %44 = vst [vmem:[#allocation2 + $0x11] sm:$0x1] 0.0
      %45 = vst [vmem:[#allocation2 + $0x12] sm:$0x1] 0.0
    $region13: #{tpu_custom_call.1} parent=1 // pred_fallthru
      _
    %v46 = vld [vmem:[#allocation3] sm:$0xff]
    %s47 = scalar_lea.vmem [#allocation3], 8
    %v48 = vld [vmem:[%s47] sm:$0xff]
    %s49 = scalar_lea.vmem [#allocation3], 16
    %v50 = vld [vmem:[%s49] sm:$0xff]
    %v51 = vsub.f32 %v46, %v50
    %v52 = vand.u32 2147483647, %v51
    %vm53 = vcmp.lt.f32.partialorder %v52, 1.0
    %v54 = vmul.f32 %v51, 0.5
    %v55 = vmul.f32 %v54, %v51
    %v56 = vsub.f32 %v52, 0.5
    %v57 = vsel %vm53, %v55, %v56
    %v58 = vld [vmem:[#allocation2] sm:$0x1]
    %v59 = vrot.slane %v57, 4
    %v60 = vadd.f32 %v57, %v59
    %v61 = vrot.slane %v60, 2
    %v62 = vadd.f32 %v60, %v61
    %v63 = vrot.slane %v62, 1
    %v64 = vadd.f32 %v62, %v63
    %v65 = vadd.f32 %v58, %v64
    %66 = vst [vmem:[#allocation2] sm:$0x1] %v65
    %v67 = vmul.f32 %v48, 10.0
    %v68 = vadd.f32 %v67, 0.5
    %v69 = vfloor.f32 %v68
    %v70 = vsub.f32 %v69, 3.0
    %vm71 = vcmp.eq.f32.partialorder %v70, 0.0
    %s72 = scalar_lea.vmem [#allocation2], 1
    %v73 = vld [vmem:[%s72] sm:$0x1]
    %v74 = vsel %vm71, 1.0, 0.0
    %v75 = vrot.slane %v74, 4
    %v76 = vadd.f32 %v74, %v75
    %v77 = vrot.slane %v76, 2
    %v78 = vadd.f32 %v76, %v77
    %v79 = vrot.slane %v78, 1
    %v80 = vadd.f32 %v78, %v79
    %v81 = vadd.f32 %v73, %v80
    %82 = vst [vmem:[%s72] sm:$0x1] %v81
    %s83 = scalar_lea.vmem [#allocation2], 2
    %v84 = vld [vmem:[%s83] sm:$0x1]
    %v85 = vsel %vm71, %v50, 0.0
    %v86 = vrot.slane %v85, 4
    %v87 = vadd.f32 %v85, %v86
    %v88 = vrot.slane %v87, 2
    %v89 = vadd.f32 %v87, %v88
    %v90 = vrot.slane %v89, 1
    %v91 = vadd.f32 %v89, %v90
    %v92 = vadd.f32 %v84, %v91
    %93 = vst [vmem:[%s83] sm:$0x1] %v92
    %s94 = scalar_lea.vmem [#allocation2], 3
    %v95 = vld [vmem:[%s94] sm:$0x1]
    %v96 = vsel %vm71, %v46, 0.0
    %v97 = vrot.slane %v96, 4
    %v98 = vadd.f32 %v96, %v97
    %v99 = vrot.slane %v98, 2
    %v100 = vadd.f32 %v98, %v99
    %v101 = vrot.slane %v100, 1
    %v102 = vadd.f32 %v100, %v101
    %v103 = vadd.f32 %v95, %v102
    %104 = vst [vmem:[%s94] sm:$0x1] %v103
    %vm105 = vcmp.eq.f32.partialorder %v70, 1.0
    %s106 = scalar_lea.vmem [#allocation2], 4
    %v107 = vld [vmem:[%s106] sm:$0x1]
    %v108 = vsel %vm105, 1.0, 0.0
    %v109 = vrot.slane %v108, 4
    %v110 = vadd.f32 %v108, %v109
    %v111 = vrot.slane %v110, 2
    %v112 = vadd.f32 %v110, %v111
    %v113 = vrot.slane %v112, 1
    %v114 = vadd.f32 %v112, %v113
    %v115 = vadd.f32 %v107, %v114
    %116 = vst [vmem:[%s106] sm:$0x1] %v115
    %s117 = scalar_lea.vmem [#allocation2], 5
    %v118 = vld [vmem:[%s117] sm:$0x1]
    %v119 = vsel %vm105, %v50, 0.0
    %v120 = vrot.slane %v119, 4
    %v121 = vadd.f32 %v119, %v120
    %v122 = vrot.slane %v121, 2
    %v123 = vadd.f32 %v121, %v122
    %v124 = vrot.slane %v123, 1
    %v125 = vadd.f32 %v123, %v124
    %v126 = vadd.f32 %v118, %v125
    %127 = vst [vmem:[%s117] sm:$0x1] %v126
    %s128 = scalar_lea.vmem [#allocation2], 6
    %v129 = vld [vmem:[%s128] sm:$0x1]
    %v130 = vsel %vm105, %v46, 0.0
    %v131 = vrot.slane %v130, 4
    %v132 = vadd.f32 %v130, %v131
    %v133 = vrot.slane %v132, 2
    %v134 = vadd.f32 %v132, %v133
    %v135 = vrot.slane %v134, 1
    %v136 = vadd.f32 %v134, %v135
    %v137 = vadd.f32 %v129, %v136
    %138 = vst [vmem:[%s128] sm:$0x1] %v137
    %vm139 = vcmp.eq.f32.partialorder %v70, 2.0
    %s140 = scalar_lea.vmem [#allocation2], 7
    %v141 = vld [vmem:[%s140] sm:$0x1]
    %v142 = vsel %vm139, 1.0, 0.0
    %v143 = vrot.slane %v142, 4
    %v144 = vadd.f32 %v142, %v143
    %v145 = vrot.slane %v144, 2
    %v146 = vadd.f32 %v144, %v145
    %v147 = vrot.slane %v146, 1
    %v148 = vadd.f32 %v146, %v147
    %v149 = vadd.f32 %v141, %v148
    %150 = vst [vmem:[%s140] sm:$0x1] %v149
    %s151 = scalar_lea.vmem [#allocation2], 8
    %v152 = vld [vmem:[%s151] sm:$0x1]
    %v153 = vsel %vm139, %v50, 0.0
    %v154 = vrot.slane %v153, 4
    %v155 = vadd.f32 %v153, %v154
    %v156 = vrot.slane %v155, 2
    %v157 = vadd.f32 %v155, %v156
    %v158 = vrot.slane %v157, 1
    %v159 = vadd.f32 %v157, %v158
    %v160 = vadd.f32 %v152, %v159
    %161 = vst [vmem:[%s151] sm:$0x1] %v160
    %s162 = scalar_lea.vmem [#allocation2], 9
    %v163 = vld [vmem:[%s162] sm:$0x1]
    %v164 = vsel %vm139, %v46, 0.0
    %v165 = vrot.slane %v164, 4
    %v166 = vadd.f32 %v164, %v165
    %v167 = vrot.slane %v166, 2
    %v168 = vadd.f32 %v166, %v167
    %v169 = vrot.slane %v168, 1
    %v170 = vadd.f32 %v168, %v169
    %v171 = vadd.f32 %v163, %v170
    %172 = vst [vmem:[%s162] sm:$0x1] %v171
    %vm173 = vcmp.eq.f32.partialorder %v70, 3.0
    %s174 = scalar_lea.vmem [#allocation2], 10
    %v175 = vld [vmem:[%s174] sm:$0x1]
    %v176 = vsel %vm173, 1.0, 0.0
    %v177 = vrot.slane %v176, 4
    %v178 = vadd.f32 %v176, %v177
    %v179 = vrot.slane %v178, 2
    %v180 = vadd.f32 %v178, %v179
    %v181 = vrot.slane %v180, 1
    %v182 = vadd.f32 %v180, %v181
    %v183 = vadd.f32 %v175, %v182
    %184 = vst [vmem:[%s174] sm:$0x1] %v183
    %s185 = scalar_lea.vmem [#allocation2], 11
    %v186 = vld [vmem:[%s185] sm:$0x1]
    %v187 = vsel %vm173, %v50, 0.0
    %v188 = vrot.slane %v187, 4
    %v189 = vadd.f32 %v187, %v188
    %v190 = vrot.slane %v189, 2
    %v191 = vadd.f32 %v189, %v190
    %v192 = vrot.slane %v191, 1
    %v193 = vadd.f32 %v191, %v192
    %v194 = vadd.f32 %v186, %v193
    %195 = vst [vmem:[%s185] sm:$0x1] %v194
    %s196 = scalar_lea.vmem [#allocation2], 12
    %v197 = vld [vmem:[%s196] sm:$0x1]
    %v198 = vsel %vm173, %v46, 0.0
    %v199 = vrot.slane %v198, 4
    %v200 = vadd.f32 %v198, %v199
    %v201 = vrot.slane %v200, 2
    %v202 = vadd.f32 %v200, %v201
    %v203 = vrot.slane %v202, 1
    %v204 = vadd.f32 %v202, %v203
    %v205 = vadd.f32 %v197, %v204
    %206 = vst [vmem:[%s196] sm:$0x1] %v205
    %vm207 = vcmp.eq.f32.partialorder %v70, 4.0
    %s208 = scalar_lea.vmem [#allocation2], 13
    %v209 = vld [vmem:[%s208] sm:$0x1]
    %v210 = vsel %vm207, 1.0, 0.0
    %v211 = vrot.slane %v210, 4
    %v212 = vadd.f32 %v210, %v211
    %v213 = vrot.slane %v212, 2
    %v214 = vadd.f32 %v212, %v213
    %v215 = vrot.slane %v214, 1
    %v216 = vadd.f32 %v214, %v215
    %v217 = vadd.f32 %v209, %v216
    %218 = vst [vmem:[%s208] sm:$0x1] %v217
    %s219 = scalar_lea.vmem [#allocation2], 14
    %v220 = vld [vmem:[%s219] sm:$0x1]
    %v221 = vsel %vm207, %v50, 0.0
    %v222 = vrot.slane %v221, 4
    %v223 = vadd.f32 %v221, %v222
    %v224 = vrot.slane %v223, 2
    %v225 = vadd.f32 %v223, %v224
    %v226 = vrot.slane %v225, 1
    %v227 = vadd.f32 %v225, %v226
    %v228 = vadd.f32 %v220, %v227
    %229 = vst [vmem:[%s219] sm:$0x1] %v228
    %s230 = scalar_lea.vmem [#allocation2], 15
    %v231 = vld [vmem:[%s230] sm:$0x1]
    %v232 = vsel %vm207, %v46, 0.0
    %v233 = vrot.slane %v232, 4
    %v234 = vadd.f32 %v232, %v233
    %v235 = vrot.slane %v234, 2
    %v236 = vadd.f32 %v234, %v235
    %v237 = vrot.slane %v236, 1
    %v238 = vadd.f32 %v236, %v237
    %v239 = vadd.f32 %v231, %v238
    %240 = vst [vmem:[%s230] sm:$0x1] %v239
    %vm241 = vcmp.eq.f32.partialorder %v70, 5.0
    %s242 = scalar_lea.vmem [#allocation2], 16
    %v243 = vld [vmem:[%s242] sm:$0x1]
    %v244 = vsel %vm241, 1.0, 0.0
    %v245 = vrot.slane %v244, 4
    %v246 = vadd.f32 %v244, %v245
    %v247 = vrot.slane %v246, 2
    %v248 = vadd.f32 %v246, %v247
    %v249 = vrot.slane %v248, 1
    %v250 = vadd.f32 %v248, %v249
    %v251 = vadd.f32 %v243, %v250
    %252 = vst [vmem:[%s242] sm:$0x1] %v251
    %s253 = scalar_lea.vmem [#allocation2], 17
    %v254 = vld [vmem:[%s253] sm:$0x1]
    %v255 = vsel %vm241, %v50, 0.0
    %v256 = vrot.slane %v255, 4
    %v257 = vadd.f32 %v255, %v256
    %v258 = vrot.slane %v257, 2
    %v259 = vadd.f32 %v257, %v258
    %v260 = vrot.slane %v259, 1
    %v261 = vadd.f32 %v259, %v260
    %v262 = vadd.f32 %v254, %v261
    %263 = vst [vmem:[%s253] sm:$0x1] %v262
    %s264 = scalar_lea.vmem [#allocation2], 18
    %v265 = vld [vmem:[%s264] sm:$0x1]
    %v266 = vsel %vm241, %v46, 0.0
    %v267 = vrot.slane %v266, 4
    %v268 = vadd.f32 %v266, %v267
    %v269 = vrot.slane %v268, 2
    %v270 = vadd.f32 %v268, %v269
    %v271 = vrot.slane %v270, 1
    %v272 = vadd.f32 %v270, %v271
    %v273 = vadd.f32 %v265, %v272
    %274 = vst [vmem:[%s264] sm:$0x1] %v273
    // Predicated region
    $region14: #{tpu_custom_call.1} parent=1 // pred_check
      %p275 = pneg %p23
    $region15: #{tpu_custom_call.1} parent=1 // pred_check_branch
      %277 = sbr.rel (%p275) target = $region17
    $region16: #{tpu_custom_call.1} parent=1 // pred_region
      %v278 = vld [vmem:[#allocation2] sm:$0x1]
      %vm279 = vcmask 1040384
      %v280 = vsel %vm279, %v278, 0.0
      %281 = vadd.xlane.f32.xlu0 %v280
      %v282 = vpop.xlane.xlu0 %281
      %v283 = vrcp.pop 8.0
      %v284 = vmul.f32 %v282, %v283
      %v285 = vld [vmem:[%s72] sm:$0x1]
      %v286 = vsel %vm279, %v285, 0.0
      %287 = vadd.xlane.f32.xlu0 %v286
      %v288 = vpop.xlane.xlu0 %287
      %v289 = vld [vmem:[%s83] sm:$0x1]
      %v290 = vsel %vm279, %v289, 0.0
      %291 = vadd.xlane.f32.xlu0 %v290
      %v292 = vpop.xlane.xlu0 %291
      %v293 = vld [vmem:[%s94] sm:$0x1]
      %v294 = vsel %vm279, %v293, 0.0
      %295 = vadd.xlane.f32.xlu0 %v294
      %v296 = vpop.xlane.xlu0 %295
      %vm297 = vcmp.gt.f32.partialorder %v288, 0.0
      %v298 = vmax.f32 %v288, 1.0
      %v299 = vrcp.pop %v298
      %v300 = vmul.f32 %v292, %v299
      %v301 = vsel %vm297, %v300, 0.0
      %v302 = vmul.f32 %v296, %v299
      %v303 = vsel %vm297, %v302, 0.0
      %v304 = vld [vmem:[%s106] sm:$0x1]
      %v305 = vsel %vm279, %v304, 0.0
      %306 = vadd.xlane.f32.xlu0 %v305
      %v307 = vpop.xlane.xlu0 %306
      %v308 = vld [vmem:[%s117] sm:$0x1]
      %v309 = vsel %vm279, %v308, 0.0
      %310 = vadd.xlane.f32.xlu0 %v309
      %v311 = vpop.xlane.xlu0 %310
      %v312 = vld [vmem:[%s128] sm:$0x1]
      %v313 = vsel %vm279, %v312, 0.0
      %314 = vadd.xlane.f32.xlu0 %v313
      %v315 = vpop.xlane.xlu0 %314
      %vm316 = vcmp.gt.f32.partialorder %v307, 0.0
      %v317 = vmax.f32 %v307, 1.0
      %v318 = vrcp.pop %v317
      %v319 = vmul.f32 %v311, %v318
      %v320 = vsel %vm316, %v319, 0.0
      %v321 = vmul.f32 %v315, %v318
      %v322 = vsel %vm316, %v321, 0.0
      %v323 = vld [vmem:[%s140] sm:$0x1]
      %v324 = vsel %vm279, %v323, 0.0
      %325 = vadd.xlane.f32.xlu0 %v324
      %v326 = vpop.xlane.xlu0 %325
      %v327 = vld [vmem:[%s151] sm:$0x1]
      %v328 = vsel %vm279, %v327, 0.0
      %329 = vadd.xlane.f32.xlu0 %v328
      %v330 = vpop.xlane.xlu0 %329
      %v331 = vld [vmem:[%s162] sm:$0x1]
      %v332 = vsel %vm279, %v331, 0.0
      %333 = vadd.xlane.f32.xlu0 %v332
      %v334 = vpop.xlane.xlu0 %333
      %vm335 = vcmp.gt.f32.partialorder %v326, 0.0
      %v336 = vmax.f32 %v326, 1.0
      %v337 = vrcp.pop %v336
      %v338 = vmul.f32 %v330, %v337
      %v339 = vsel %vm335, %v338, 0.0
      %v340 = vmul.f32 %v334, %v337
      %v341 = vsel %vm335, %v340, 0.0
      %v342 = vld [vmem:[%s174] sm:$0x1]
      %v343 = vsel %vm279, %v342, 0.0
      %344 = vadd.xlane.f32.xlu0 %v343
      %v345 = vpop.xlane.xlu0 %344
      %v346 = vld [vmem:[%s185] sm:$0x1]
      %v347 = vsel %vm279, %v346, 0.0
      %348 = vadd.xlane.f32.xlu0 %v347
      %v349 = vpop.xlane.xlu0 %348
      %v350 = vld [vmem:[%s196] sm:$0x1]
      %v351 = vsel %vm279, %v350, 0.0
      %352 = vadd.xlane.f32.xlu0 %v351
      %v353 = vpop.xlane.xlu0 %352
      %vm354 = vcmp.gt.f32.partialorder %v345, 0.0
      %v355 = vmax.f32 %v345, 1.0
      %v356 = vrcp.pop %v355
      %v357 = vmul.f32 %v349, %v356
      %v358 = vsel %vm354, %v357, 0.0
      %v359 = vmul.f32 %v353, %v356
      %v360 = vsel %vm354, %v359, 0.0
      %v361 = vld [vmem:[%s208] sm:$0x1]
      %v362 = vsel %vm279, %v361, 0.0
      %363 = vadd.xlane.f32.xlu0 %v362
      %v364 = vpop.xlane.xlu0 %363
      %v365 = vld [vmem:[%s219] sm:$0x1]
      %v366 = vsel %vm279, %v365, 0.0
      %367 = vadd.xlane.f32.xlu0 %v366
      %v368 = vpop.xlane.xlu0 %367
      %v369 = vld [vmem:[%s230] sm:$0x1]
      %v370 = vsel %vm279, %v369, 0.0
      %371 = vadd.xlane.f32.xlu0 %v370
      %v372 = vpop.xlane.xlu0 %371
      %vm373 = vcmp.gt.f32.partialorder %v364, 0.0
      %v374 = vmax.f32 %v364, 1.0
      %v375 = vrcp.pop %v374
      %v376 = vmul.f32 %v368, %v375
      %v377 = vsel %vm373, %v376, 0.0
      %v378 = vmul.f32 %v372, %v375
      %v379 = vsel %vm373, %v378, 0.0
      %v380 = vld [vmem:[%s242] sm:$0x1]
      %v381 = vsel %vm279, %v380, 0.0
      %382 = vadd.xlane.f32.xlu0 %v381
      %v383 = vpop.xlane.xlu0 %382
      %v384 = vld [vmem:[%s253] sm:$0x1]
      %v385 = vsel %vm279, %v384, 0.0
      %386 = vadd.xlane.f32.xlu0 %v385
      %v387 = vpop.xlane.xlu0 %386
      %v388 = vld [vmem:[%s264] sm:$0x1]
      %v389 = vsel %vm279, %v388, 0.0
      %390 = vadd.xlane.f32.xlu0 %v389
      %v391 = vpop.xlane.xlu0 %390
      %vm392 = vcmp.gt.f32.partialorder %v383, 0.0
      %v393 = vmax.f32 %v383, 1.0
      %v394 = vrcp.pop %v393
      %v395 = vmul.f32 %v387, %v394
      %v396 = vsel %vm392, %v395, 0.0
      %v397 = vmul.f32 %v391, %v394
      %v398 = vsel %vm392, %v397, 0.0
      %v399 = vsub.f32 %v301, %v320
      %v400 = vsub.f32 %v303, %v322
      %v401 = vsub.f32 %v399, %v400
      %v402 = vand.u32 2147483647, %v401
      %v403 = vadd.f32 %v402, 0.0
      %v404 = vsub.f32 %v301, %v339
      %v405 = vsub.f32 %v303, %v341
      %v406 = vsub.f32 %v404, %v405
      %v407 = vand.u32 2147483647, %v406
      %v408 = vadd.f32 %v403, %v407
      %v409 = vsub.f32 %v301, %v358
      %v410 = vsub.f32 %v303, %v360
      %v411 = vsub.f32 %v409, %v410
      %v412 = vand.u32 2147483647, %v411
      %v413 = vadd.f32 %v408, %v412
      %v414 = vsub.f32 %v301, %v377
      %v415 = vsub.f32 %v303, %v379
      %v416 = vsub.f32 %v414, %v415
      %v417 = vand.u32 2147483647, %v416
      %v418 = vadd.f32 %v413, %v417
      %v419 = vsub.f32 %v301, %v396
      %v420 = vsub.f32 %v303, %v398
      %v421 = vsub.f32 %v419, %v420
      %v422 = vand.u32 2147483647, %v421
      %v423 = vadd.f32 %v418, %v422
      %v424 = vsub.f32 %v320, %v339
      %v425 = vsub.f32 %v322, %v341
      %v426 = vsub.f32 %v424, %v425
      %v427 = vand.u32 2147483647, %v426
      %v428 = vadd.f32 %v423, %v427
      %v429 = vsub.f32 %v320, %v358
      %v430 = vsub.f32 %v322, %v360
      %v431 = vsub.f32 %v429, %v430
      %v432 = vand.u32 2147483647, %v431
      %v433 = vadd.f32 %v428, %v432
      %v434 = vsub.f32 %v320, %v377
      %v435 = vsub.f32 %v322, %v379
      %v436 = vsub.f32 %v434, %v435
      %v437 = vand.u32 2147483647, %v436
      %v438 = vadd.f32 %v433, %v437
      %v439 = vsub.f32 %v320, %v396
      %v440 = vsub.f32 %v322, %v398
      %v441 = vsub.f32 %v439, %v440
      %v442 = vand.u32 2147483647, %v441
      %v443 = vadd.f32 %v438, %v442
      %v444 = vsub.f32 %v339, %v358
      %v445 = vsub.f32 %v341, %v360
      %v446 = vsub.f32 %v444, %v445
      %v447 = vand.u32 2147483647, %v446
      %v448 = vadd.f32 %v443, %v447
      %v449 = vsub.f32 %v339, %v377
      %v450 = vsub.f32 %v341, %v379
      %v451 = vsub.f32 %v449, %v450
      %v452 = vand.u32 2147483647, %v451
      %v453 = vadd.f32 %v448, %v452
      %v454 = vsub.f32 %v339, %v396
      %v455 = vsub.f32 %v341, %v398
      %v456 = vsub.f32 %v454, %v455
      %v457 = vand.u32 2147483647, %v456
      %v458 = vadd.f32 %v453, %v457
      %v459 = vsub.f32 %v358, %v377
      %v460 = vsub.f32 %v360, %v379
      %v461 = vsub.f32 %v459, %v460
      %v462 = vand.u32 2147483647, %v461
      %v463 = vadd.f32 %v458, %v462
      %v464 = vsub.f32 %v358, %v396
      %v465 = vsub.f32 %v360, %v398
      %v466 = vsub.f32 %v464, %v465
      %v467 = vand.u32 2147483647, %v466
      %v468 = vadd.f32 %v463, %v467
      %v469 = vsub.f32 %v377, %v396
      %v470 = vsub.f32 %v379, %v398
      %v471 = vsub.f32 %v469, %v470
      %v472 = vand.u32 2147483647, %v471
      %v473 = vadd.f32 %v468, %v472
      %v474 = vmul.f32 %v473, 0.067
      %v475 = vmul.f32 %v474, 4.0
      %v476 = vadd.f32 %v284, %v475
      %vm477 = vcmask 0
      %478 = vst.msk [vmem:[#allocation6] sm:$0x1] %vm477, %v476
    $region17: #{tpu_custom_call.1} parent=1 // pred_fallthru
      _
    // Predicated region
    $region18: #{tpu_custom_call.1} parent=1 // pred_check
      _
    $region19: #{tpu_custom_call.1} parent=1 // pred_check_branch
      %480 = sbr.rel (0) target = $region21
    $region20: #{tpu_custom_call.1} parent=1 // pred_region
      %s482 = ssub.s32 16, 16
      %483 = vsyncadd [#allocation5], %s482
      %s485 = sshll.u32 [#allocation6], 4
      %s486 = int_to_ptr.vmem [resolvable:$true] %s485
      %488 = dma.vmem_to_hbm [thread:$0]  %s486, 16, %s1, [#allocation5]
    $region21: #{tpu_custom_call.1} parent=1 // pred_fallthru
      _
    // Predicated region
    $region22: #{tpu_custom_call.1} parent=1 // pred_check
      _
    $region23: #{tpu_custom_call.1} parent=1 // pred_check_branch
      %490 = sbr.rel (0) target = $region25
    $region24: #{tpu_custom_call.1} parent=1 // pred_region
      %491 = dma.done [#allocation5], 16
    $region25: #{tpu_custom_call.1} parent=1 // pred_fallthru
      _
    %492 = vsyncpa [#allocation4], 1
    %493 = vsyncpa [#allocation5], 1

</llo_original>
